<compile_context>
chip_gen: v7x
topology: tpu7x:2x2x1
jax: 0.10.0
libtpu: 0.0.40
codegen_flags: <defaults>
</compile_context>

<pallas_src>
import functools

import jax
import jax.numpy as jnp
from jax import lax
from jax.experimental import pallas as pl
from jax.experimental.pallas import tpu as pltpu


# ------------------------------ helpers -------------------------------------

def _round_up(x, m):
    return (x + m - 1) // m * m


def _pad_to(x, shape):
    pads = [(0, t - s) for s, t in zip(x.shape, shape)]
    if all(p == (0, 0) for p in pads):
        return x
    return jnp.pad(x, pads)


def _vmem_limit_bytes():
    """Scoped-VMEM budget derived from the actual part (v5e/v6e: 128 MiB, v7x: 64 MiB)."""
    try:
        cap = int(pltpu.get_tpu_info().vmem_capacity_bytes)
    except Exception:  # conservative fallback if the query is unavailable
        cap = 64 * 1024 * 1024
    return max(32 * 1024 * 1024, min(cap // 2, 96 * 1024 * 1024))


def _use_fused(b, sq, sk, e, num_heads):
    """True when the whole forward comfortably fits in VMEM for a per-batch grid step."""
    per_step = 4 * (sq * e + 2 * sk * e            # activations streamed in
                    + 4 * e * e + 4 * e            # weights + biases (resident)
                    + 4 * sq * e + 2 * sk * e      # q / out / o plus k, v intermediates
                    + num_heads * sq * sk)         # unrolled per-head score matrices
    return 3 * per_step < 8 * 1024 * 1024


_CDN_NT = (((1,), (1,)), ((), ()))   # contract last dims of both operands (x @ W^T)


# ----------------------------- Pallas kernels ------------------------------

def _linear_kernel(x_ref, w_ref, b_ref, o_ref, *, compute_dtype):
    """One (i, j, k) step of y = x @ w^T + b, accumulating directly into o_ref (f32).

    Blocks: x (tm, tk), w (tn, tk), b (1, tn), o (tm, tn) -- o is resident across
    the trailing K grid axis; bias is folded in at the k==0 init.
    """
    @pl.when(pl.program_id(2) == 0)
    def _init():
        o_ref[...] = jnp.broadcast_to(b_ref[...], o_ref.shape).astype(o_ref.dtype)

    x = x_ref[...].astype(compute_dtype)
    w = w_ref[...].astype(compute_dtype)
    o_ref[...] += lax.dot_general(x, w, _CDN_NT,
                                  preferred_element_type=jnp.float32).astype(o_ref.dtype)


def _flash_kernel(q_ref, k_ref, v_ref, o_ref, m_ref, l_ref, acc_ref, *,
                  num_heads, head_dim, kv_tile, sk_valid, needs_mask, compute_dtype):
    """Online-softmax attention step on lane-dense (tile, E) slabs; heads looped inside.

    q_ref: (1, tq, E), k_ref/v_ref: (1, tk, E), o_ref: (1, tq, E)
    m_ref/l_ref: (H, tq, 128) lane-replicated running max / denominator
    acc_ref:     (tq, E) f32 output accumulator (normalized + stored once at finalize)
    """
    kv = pl.program_id(2)

    @pl.when(kv == 0)
    def _init():
        m_ref[...] = jnp.full(m_ref.shape, -1e30, m_ref.dtype)
        l_ref[...] = jnp.zeros_like(l_ref)
        acc_ref[...] = jnp.zeros_like(acc_ref)

    q = q_ref[0]          # (tq, E); softmax scale already folded into Wq/bq
    k = k_ref[0]          # (tk, E)
    v = v_ref[0]

    if needs_mask:        # static python branch: only emitted when Sk was padded
        col = kv * kv_tile + lax.broadcasted_iota(jnp.int32, (1, kv_tile), 1)
        colmask = col < sk_valid                       # (1, tk)

    for h in range(num_heads):                         # static unrolled head loop
        sl = slice(h * head_dim, (h + 1) * head_dim)
        s = lax.dot_general(q[:, sl].astype(compute_dtype),
                            k[:, sl].astype(compute_dtype), _CDN_NT,
                            preferred_element_type=jnp.float32)      # (tq, tk)
        if needs_mask:
            s = jnp.where(colmask, s, -1e30)

        m_prev = m_ref[h]                                            # (tq, 128)
        m_new = jnp.maximum(m_prev, jnp.max(s, axis=-1, keepdims=True))
        alpha = jnp.exp(m_prev - m_new)                              # (tq, 128)
        p = jnp.exp(s - m_new[:, :1])                                # (tq, tk)
        if needs_mask:
            # Zero padded columns explicitly so even a (hypothetical) fully-masked
            # tile cannot pollute l / acc through the -1e30 sentinel.
            p = jnp.where(colmask, p, 0.0)

        l_ref[h] = alpha * l_ref[h] + jnp.sum(p, axis=-1, keepdims=True)
        acc_ref[:, sl] = alpha[:, :1] * acc_ref[:, sl] + jnp.dot(
            p.astype(compute_dtype), v[:, sl].astype(compute_dtype),
            preferred_element_type=jnp.float32)
        m_ref[h] = m_new

    @pl.when(kv == pl.num_programs(2) - 1)
    def _finalize():
        cols = []
        for h in range(num_heads):
            l_h = l_ref[h][:, :1]                                    # (tq, 1)
            inv = pl.reciprocal(l_h, approx=True)                    # EUP slot
            inv = inv * (2.0 - l_h * inv)                            # Newton -> ~f32 accuracy
            cols.append(jnp.broadcast_to(inv, (inv.shape[0], head_dim)))
        inv_full = jnp.concatenate(cols, axis=-1)                    # (tq, E)
        o_ref[0] = (acc_ref[...] * inv_full).astype(o_ref.dtype)     # lane-dense single store


def _fused_mha_kernel(xq_ref, xk_ref, xv_ref,
                      wq_ref, wk_ref, wv_ref, wo_ref,
                      bq_ref, bk_ref, bv_ref, bo_ref,
                      o_ref, *, num_heads):
    """Whole CrossAttention forward for ONE batch element, entirely in VMEM.

    xq_ref: (1, Sq, E), xk_ref/xv_ref: (1, Sk, E), weights (E, E) as (out, in),
    biases (1, E), o_ref: (1, Sq, E).  Softmax scale is pre-folded into wq/bq.
    """
    f32 = jnp.float32
    xq = xq_ref[0].astype(f32)
    xk = xk_ref[0].astype(f32)
    xv = xv_ref[0].astype(f32)

    q = lax.dot_general(xq, wq_ref[...], _CDN_NT, preferred_element_type=f32) + bq_ref[...]
    k = lax.dot_general(xk, wk_ref[...], _CDN_NT, preferred_element_type=f32) + bk_ref[...]
    v = lax.dot_general(xv, wv_ref[...], _CDN_NT, preferred_element_type=f32) + bv_ref[...]

    sq_len, e = q.shape
    dh = e // num_heads

    # Accumulate the out-projection head-by-head: out = bo + sum_h (o_h @ Wo[:, h]^T)
    out = jnp.broadcast_to(bo_ref[...].astype(f32), (sq_len, e))
    for h in range(num_heads):                          # static unrolled head loop
        sl = slice(h * dh, (h + 1) * dh)
        s = lax.dot_general(q[:, sl], k[:, sl], _CDN_NT,
                            preferred_element_type=f32)              # (Sq, Sk)
        s = s - jnp.max(s, axis=-1, keepdims=True)
        p = jnp.exp(s)
        denom = jnp.sum(p, axis=-1, keepdims=True)
        oh = jnp.dot(p, v[:, sl], preferred_element_type=f32) / denom  # (Sq, Dh)
        out = out + lax.dot_general(oh, wo_ref[:, sl], _CDN_NT,
                                    preferred_element_type=f32)
    o_ref[0] = out.astype(o_ref.dtype)


# ------------------------------ wrappers ------------------------------------

def _linear(x, w, bias, *, compute_dtype, vmem_limit):
    """y = x @ w^T + bias.  x: (M, K), w: (N, K), bias: (N,) -> (M, N) f32."""
    m, kdim = x.shape
    n = w.shape[0]

    if vmem_limit >= 48 * 1024 * 1024:           # v5e / v6e: bigger tiles
        tm_max, tn_max, tk_max = 512, 512, 1024
    else:                                        # v7x: 64 MiB physical VMEM
        tm_max, tn_max, tk_max = 256, 512, 512

    tm = min(tm_max, _round_up(m, 8))
    # Expose >=2 "parallel" M blocks where possible (v7x has 2 TensorCores).
    if m >= 16 and _round_up(m, tm) // tm < 2:
        tm = _round_up(pl.cdiv(m, 2), 8)
    tn = min(tn_max, _round_up(n, 128))
    tk = min(tk_max, _round_up(kdim, 128))
    mp, np_, kp = _round_up(m, tm), _round_up(n, tn), _round_up(kdim, tk)

    xp = _pad_to(x, (mp, kp))
    wp = _pad_to(w, (np_, kp))
    bp = _pad_to(bias.reshape(1, n), (1, np_))

    grid = (mp // tm, np_ // tn, kp // tk)
    kernel = functools.partial(_linear_kernel, compute_dtype=compute_dtype)
    cost = pl.CostEstimate(
        flops=2 * mp * np_ * kp, transcendentals=0,
        bytes_accessed=4 * (xp.size + wp.size + bp.size + mp * np_))

    out = pl.pallas_call(
        kernel,
        out_shape=jax.ShapeDtypeStruct((mp, np_), jnp.float32),
        grid=grid,
        in_specs=[
            pl.BlockSpec((tm, tk), lambda i, j, kk: (i, kk)),
            pl.BlockSpec((tn, tk), lambda i, j, kk: (j, kk)),
            pl.BlockSpec((1, tn), lambda i, j, kk: (0, j)),
        ],
        out_specs=pl.BlockSpec((tm, tn), lambda i, j, kk: (i, j)),
        compiler_params=pltpu.CompilerParams(
            dimension_semantics=("parallel", "parallel", "arbitrary"),
            vmem_limit_bytes=vmem_limit),
        cost_estimate=cost,
    )(xp, wp, bp)
    return out[:m, :n]


def _flash_mha(q, k, v, *, num_heads, compute_dtype, vmem_limit):
    """q: (B, Sq, E), k/v: (B, Sk, E) -> (B, Sq, E).  Heads handled inside the kernel."""
    b, sq, e = q.shape
    sk = k.shape[1]
    dh = e // num_heads

    tq_max = 256
    tk_max = 256 if vmem_limit >= 48 * 1024 * 1024 else 128   # tighter on v7x
    tq = min(tq_max, _round_up(sq, 8))
    tk = min(tk_max, _round_up(sk, 8))
    sq_p, sk_p = _round_up(sq, tq), _round_up(sk, tk)

    qp = _pad_to(q, (b, sq_p, e))
    kp_ = _pad_to(k, (b, sk_p, e))
    vp = _pad_to(v, (b, sk_p, e))

    kernel = functools.partial(
        _flash_kernel, num_heads=num_heads, head_dim=dh, kv_tile=tk,
        sk_valid=sk, needs_mask=(sk_p != sk), compute_dtype=compute_dtype)

    grid = (b, sq_p // tq, sk_p // tk)
    cost = pl.CostEstimate(
        flops=4 * b * num_heads * sq_p * sk_p * dh,
        transcendentals=b * num_heads * sq_p * sk_p,
        bytes_accessed=4 * (qp.size + kp_.size + vp.size + b * sq_p * e))

    out = pl.pallas_call(
        kernel,
        out_shape=jax.ShapeDtypeStruct((b, sq_p, e), jnp.float32),
        grid=grid,
        in_specs=[
            pl.BlockSpec((1, tq, e), lambda bi, i, j: (bi, i, 0)),
            pl.BlockSpec((1, tk, e), lambda bi, i, j: (bi, j, 0)),
            pl.BlockSpec((1, tk, e), lambda bi, i, j: (bi, j, 0)),
        ],
        out_specs=pl.BlockSpec((1, tq, e), lambda bi, i, j: (bi, i, 0)),
        scratch_shapes=[
            pltpu.VMEM((num_heads, tq, 128), jnp.float32),  # running max, lane-replicated
            pltpu.VMEM((num_heads, tq, 128), jnp.float32),  # running denom, lane-replicated
            pltpu.VMEM((tq, e), jnp.float32),               # lane-dense output accumulator
        ],
        compiler_params=pltpu.CompilerParams(
            dimension_semantics=("parallel", "parallel", "arbitrary"),
            vmem_limit_bytes=vmem_limit),
        cost_estimate=cost,
    )(qp, kp_, vp)
    return out[:, :sq, :]


def _fused_cross_attention(query, key, value, wq, wk, wv, wo, bq, bk, bv, bo,
                           *, num_heads, vmem_limit):
    """Whole forward in one pallas_call; grid over batch ('parallel' for 2-TC parts)."""
    b, sq, e = query.shape
    sk = key.shape[1]
    dh = e // num_heads

    kernel = functools.partial(_fused_mha_kernel, num_heads=num_heads)
    wmap = lambda bi: (0, 0)
    cost = pl.CostEstimate(
        flops=2 * b * (sq + 2 * sk) * e * e
              + 4 * b * num_heads * sq * sk * dh
              + 2 * b * sq * e * e,
        transcendentals=b * num_heads * sq * sk,
        bytes_accessed=4 * (b * (sq + 2 * sk) * e + 4 * e * e + 4 * e + b * sq * e))

    return pl.pallas_call(
        kernel,
        out_shape=jax.ShapeDtypeStruct((b, sq, e), query.dtype),
        grid=(b,),
        in_specs=[
            pl.BlockSpec((1, sq, e), lambda bi: (bi, 0, 0)),
            pl.BlockSpec((1, sk, e), lambda bi: (bi, 0, 0)),
            pl.BlockSpec((1, sk, e), lambda bi: (bi, 0, 0)),
            pl.BlockSpec((e, e), wmap),
            pl.BlockSpec((e, e), wmap),
            pl.BlockSpec((e, e), wmap),
            pl.BlockSpec((e, e), wmap),
            pl.BlockSpec((1, e), wmap),
            pl.BlockSpec((1, e), wmap),
            pl.BlockSpec((1, e), wmap),
            pl.BlockSpec((1, e), wmap),
        ],
        out_specs=pl.BlockSpec((1, sq, e), lambda bi: (bi, 0, 0)),
        compiler_params=pltpu.CompilerParams(
            dimension_semantics=("parallel",),
            vmem_limit_bytes=vmem_limit),
        cost_estimate=cost,
    )(query, key, value, wq, wk, wv, wo,
      bq.reshape(1, e), bk.reshape(1, e), bv.reshape(1, e), bo.reshape(1, e))


def cross_attention(query, key, value, params, num_heads, *,
                    compute_dtype=jnp.float32, force_general=False):
    """Pallas implementation of CrossAttention.forward.

    query: (B, Sq, E), key/value: (B, Sk, E) -> (B, Sq, E).
    compute_dtype=jnp.bfloat16 casts MXU operands (f32 accumulation kept) on v6e/v7x.
    """
    in_w = params["in_proj_weight"]    # (3E, E) = [Wq; Wk; Wv]
    in_b = params["in_proj_bias"]      # (3E,)
    out_w = params["out_proj_weight"]  # (E, E)
    out_b = params["out_proj_bias"]    # (E,)

    b, sq, e = query.shape
    sk = key.shape[1]
    h = num_heads
    dh = e // h
    scale = 1.0 / (dh ** 0.5)

    # Fold the softmax scale into the query projection once (no per-step rescale).
    wq = in_w[:e] * scale
    bq = in_b[:e] * scale
    wk, wv = in_w[e:2 * e], in_w[2 * e:]
    bk, bv = in_b[e:2 * e], in_b[2 * e:]

    vmem_limit = _vmem_limit_bytes()

    # ---- small-shape fast path: everything fused in a single pallas_call --------
    if not force_general and _use_fused(b, sq, sk, e, h):
        return _fused_cross_attention(query, key, value, wq, wk, wv, out_w,
                                      bq, bk, bv, out_b,
                                      num_heads=h, vmem_limit=vmem_limit)

    # ---- general tiled path ------------------------------------------------------
    q = _linear(query.reshape(b * sq, e), wq, bq,
                compute_dtype=compute_dtype, vmem_limit=vmem_limit).reshape(b, sq, e)
    k = _linear(key.reshape(b * sk, e), wk, bk,
                compute_dtype=compute_dtype, vmem_limit=vmem_limit).reshape(b, sk, e)
    v = _linear(value.reshape(b * sk, e), wv, bv,
                compute_dtype=compute_dtype, vmem_limit=vmem_limit).reshape(b, sk, e)

    # Attention consumes the lane-dense (B, S, E) slabs directly; no head transposes.
    o = _flash_mha(q, k, v, num_heads=h,
                   compute_dtype=compute_dtype, vmem_limit=vmem_limit)

    out = _linear(o.reshape(b * sq, e), out_w, out_b,
                  compute_dtype=compute_dtype, vmem_limit=vmem_limit)
    return out.reshape(b, sq, e)


# --------------------------- reference (plain JAX) ---------------------------

def cross_attention_ref(query, key, value, params, num_heads):
    in_w, in_b, out_w, out_b = (
        params["in_proj_weight"], params["in_proj_bias"],
        params["out_proj_weight"], params["out_proj_bias"],
    )
    b, sq, e = query.shape
    sk = key.shape[1]
    h = num_heads
    dh = e // h
    wq, wk, wv = in_w[:e], in_w[e:2 * e], in_w[2 * e:]
    bq, bk, bv = in_b[:e], in_b[e:2 * e], in_b[2 * e:]
    q = query @ wq.T + bq
    k = key @ wk.T + bk
    v = value @ wv.T + bv
    qh = q.reshape(b, sq, h, dh).transpose(0, 2, 1, 3)
    kh = k.reshape(b, sk, h, dh).transpose(0, 2, 1, 3)
    vh = v.reshape(b, sk, h, dh).transpose(0, 2, 1, 3)
    s = jnp.einsum("bhqd,bhkd->bhqk", qh, kh) / (dh ** 0.5)
    p = jax.nn.softmax(s, axis=-1)
    o = jnp.einsum("bhqk,bhkd->bhqd", p, vh)
    o = o.transpose(0, 2, 1, 3).reshape(b, sq, e)
    return o @ out_w.T + out_b


# --------------------------------- main --------------------------------------

if __name__ == "__main__":
    ks = jax.random.split(jax.random.PRNGKey(0), 14)

    attn = jax.jit(cross_attention,
                   static_argnames=("num_heads", "compute_dtype", "force_general"))

    # --- 1) benchmark shape -> fully fused single-kernel fast path ----------------
    B, SQ, SK, E, H = 2, 8, 8, 32, 4
    params = {
        "in_proj_weight": 0.05 * jax.random.normal(ks[0], (3 * E, E), jnp.float32),
        "in_proj_bias": 0.05 * jax.random.normal(ks[1], (3 * E,), jnp.float32),
        "out_proj_weight": 0.05 * jax.random.normal(ks[2], (E, E), jnp.float32),
        "out_proj_bias": 0.05 * jax.random.normal(ks[3], (E,), jnp.float32),
    }
    query = jax.random.normal(ks[4], (B, SQ, E), jnp.float32)
    key_in = jax.random.normal(ks[5], (B, SK, E), jnp.float32)
    value = jax.random.normal(ks[6], (B, SK, E), jnp.float32)

    out = jax.block_until_ready(attn(query, key_in, value, params, num_heads=H))
    ref = cross_attention_ref(query, key_in, value, params, H)
    assert out.shape == (B, SQ, E)
    assert jnp.allclose(out, ref, atol=1e-4, rtol=1e-4)

    # --- 2) larger shape -> tiled general path (padding + multi-tile online softmax)
    B2, SQ2, SK2, E2, H2 = 2, 40, 320, 64, 4
    params2 = {
        "in_proj_weight": 0.05 * jax.random.normal(ks[7], (3 * E2, E2), jnp.float32),
        "in_proj_bias": 0.05 * jax.random.normal(ks[8], (3 * E2,), jnp.float32),
        "out_proj_weight": 0.05 * jax.random.normal(ks[9], (E2, E2), jnp.float32),
        "out_proj_bias": 0.05 * jax.random.normal(ks[10], (E2,), jnp.float32),
    }
    q2 = jax.random.normal(ks[11], (B2, SQ2, E2), jnp.float32)
    k2 = jax.random.normal(ks[12], (B2, SK2, E2), jnp.float32)
    v2 = jax.random.normal(ks[13], (B2, SK2, E2), jnp.float32)

    out2 = jax.block_until_ready(
        attn(q2, k2, v2, params2, num_heads=H2, force_general=True))
    ref2 = cross_attention_ref(q2, k2, v2, params2, H2)
    assert out2.shape == (B2, SQ2, E2)
    assert jnp.allclose(out2, ref2, atol=1e-4, rtol=1e-4)

    # --- 3) general path with bf16 MXU operands (v6e/v7x throughput mode) ---------
    out3 = jax.block_until_ready(
        attn(q2, k2, v2, params2, num_heads=H2, force_general=True,
             compute_dtype=jnp.bfloat16))
    assert jnp.allclose(out3, ref2, atol=5e-2, rtol=5e-2)

    print("KERNEL_OK")
</pallas_src>

<mosaic_0001>
module attributes {stable_mosaic.version = 11 : i64} {
  func.func @_fused_mha_kernel(%arg0: i32, %arg1: memref<1x8x32xf32, #tpu.memory_space<vmem>>, %arg2: memref<1x8x32xf32, #tpu.memory_space<vmem>>, %arg3: memref<1x8x32xf32, #tpu.memory_space<vmem>>, %arg4: memref<32x32xf32, #tpu.memory_space<vmem>>, %arg5: memref<32x32xf32, #tpu.memory_space<vmem>>, %arg6: memref<32x32xf32, #tpu.memory_space<vmem>>, %arg7: memref<32x32xf32, #tpu.memory_space<vmem>>, %arg8: memref<1x32xf32, #tpu.memory_space<vmem>>, %arg9: memref<1x32xf32, #tpu.memory_space<vmem>>, %arg10: memref<1x32xf32, #tpu.memory_space<vmem>>, %arg11: memref<1x32xf32, #tpu.memory_space<vmem>>, %arg12: memref<1x8x32xf32, #tpu.memory_space<vmem>>) attributes {dimension_semantics = [#tpu.dimension_semantics<parallel>], iteration_bounds = array<i64: 2>, scalar_prefetch = 0 : i64, scratch_operands = 0 : i64, tpu.core_type = #tpu.core_type<tc>, window_params = [{transform_indices = @transform_0, window_bounds = array<i64: 1, 8, 32>}, {transform_indices = @transform_1, window_bounds = array<i64: 1, 8, 32>}, {transform_indices = @transform_2, window_bounds = array<i64: 1, 8, 32>}, {pipeline_mode = #tpu.pipeline_mode<synchronous>, transform_indices = @transform_3, window_bounds = array<i64: 32, 32>}, {pipeline_mode = #tpu.pipeline_mode<synchronous>, transform_indices = @transform_4, window_bounds = array<i64: 32, 32>}, {pipeline_mode = #tpu.pipeline_mode<synchronous>, transform_indices = @transform_5, window_bounds = array<i64: 32, 32>}, {pipeline_mode = #tpu.pipeline_mode<synchronous>, transform_indices = @transform_6, window_bounds = array<i64: 32, 32>}, {pipeline_mode = #tpu.pipeline_mode<synchronous>, transform_indices = @transform_7, window_bounds = array<i64: 1, 32>}, {pipeline_mode = #tpu.pipeline_mode<synchronous>, transform_indices = @transform_8, window_bounds = array<i64: 1, 32>}, {pipeline_mode = #tpu.pipeline_mode<synchronous>, transform_indices = @transform_9, window_bounds = array<i64: 1, 32>}, {pipeline_mode = #tpu.pipeline_mode<synchronous>, transform_indices = @transform_10, window_bounds = array<i64: 1, 32>}, {transform_indices = @transform_11, window_bounds = array<i64: 1, 8, 32>}]} {
    %c0 = arith.constant 0 : index
    %c0_0 = arith.constant 0 : index
    %c0_1 = arith.constant 0 : index
    %0 = vector.load %arg1[%c0, %c0_0, %c0_1] : memref<1x8x32xf32, #tpu.memory_space<vmem>>, vector<1x8x32xf32>
    %1 = vector.shape_cast %0 : vector<1x8x32xf32> to vector<8x32xf32>
    %c0_2 = arith.constant 0 : index
    %c0_3 = arith.constant 0 : index
    %c0_4 = arith.constant 0 : index
    %2 = vector.load %arg2[%c0_2, %c0_3, %c0_4] : memref<1x8x32xf32, #tpu.memory_space<vmem>>, vector<1x8x32xf32>
    %3 = vector.shape_cast %2 : vector<1x8x32xf32> to vector<8x32xf32>
    %c0_5 = arith.constant 0 : index
    %c0_6 = arith.constant 0 : index
    %c0_7 = arith.constant 0 : index
    %4 = vector.load %arg3[%c0_5, %c0_6, %c0_7] : memref<1x8x32xf32, #tpu.memory_space<vmem>>, vector<1x8x32xf32>
    %5 = vector.shape_cast %4 : vector<1x8x32xf32> to vector<8x32xf32>
    %c0_8 = arith.constant 0 : index
    %c0_9 = arith.constant 0 : index
    %6 = vector.load %arg4[%c0_8, %c0_9] : memref<32x32xf32, #tpu.memory_space<vmem>>, vector<32x32xf32>
    %cst = arith.constant dense<0.000000e+00> : vector<8x32xf32>
    %7 = tpu.matmul %1, %6, %cst {dimension_numbers = #tpu.dot_dimension_numbers<[1], [1], [0], [0], [0, 0, 1, 0], [], []>} : vector<8x32xf32>, vector<32x32xf32>, vector<8x32xf32> -> vector<8x32xf32>
    %c0_10 = arith.constant 0 : index
    %c0_11 = arith.constant 0 : index
    %8 = vector.load %arg8[%c0_10, %c0_11] : memref<1x32xf32, #tpu.memory_space<vmem>>, vector<1x32xf32>
    %9 = vector.broadcast %8 : vector<1x32xf32> to vector<8x32xf32>
    %10 = arith.addf %7, %9 : vector<8x32xf32>
    %c0_12 = arith.constant 0 : index
    %c0_13 = arith.constant 0 : index
    %11 = vector.load %arg5[%c0_12, %c0_13] : memref<32x32xf32, #tpu.memory_space<vmem>>, vector<32x32xf32>
    %cst_14 = arith.constant dense<0.000000e+00> : vector<8x32xf32>
    %12 = tpu.matmul %3, %11, %cst_14 {dimension_numbers = #tpu.dot_dimension_numbers<[1], [1], [0], [0], [0, 0, 1, 0], [], []>} : vector<8x32xf32>, vector<32x32xf32>, vector<8x32xf32> -> vector<8x32xf32>
    %c0_15 = arith.constant 0 : index
    %c0_16 = arith.constant 0 : index
    %13 = vector.load %arg9[%c0_15, %c0_16] : memref<1x32xf32, #tpu.memory_space<vmem>>, vector<1x32xf32>
    %14 = vector.broadcast %13 : vector<1x32xf32> to vector<8x32xf32>
    %15 = arith.addf %12, %14 : vector<8x32xf32>
    %c0_17 = arith.constant 0 : index
    %c0_18 = arith.constant 0 : index
    %16 = vector.load %arg6[%c0_17, %c0_18] : memref<32x32xf32, #tpu.memory_space<vmem>>, vector<32x32xf32>
    %cst_19 = arith.constant dense<0.000000e+00> : vector<8x32xf32>
    %17 = tpu.matmul %5, %16, %cst_19 {dimension_numbers = #tpu.dot_dimension_numbers<[1], [1], [0], [0], [0, 0, 1, 0], [], []>} : vector<8x32xf32>, vector<32x32xf32>, vector<8x32xf32> -> vector<8x32xf32>
    %c0_20 = arith.constant 0 : index
    %c0_21 = arith.constant 0 : index
    %18 = vector.load %arg10[%c0_20, %c0_21] : memref<1x32xf32, #tpu.memory_space<vmem>>, vector<1x32xf32>
    %19 = vector.broadcast %18 : vector<1x32xf32> to vector<8x32xf32>
    %20 = arith.addf %17, %19 : vector<8x32xf32>
    %c0_22 = arith.constant 0 : index
    %c0_23 = arith.constant 0 : index
    %21 = vector.load %arg11[%c0_22, %c0_23] : memref<1x32xf32, #tpu.memory_space<vmem>>, vector<1x32xf32>
    %22 = vector.shape_cast %21 : vector<1x32xf32> to vector<1x32xf32>
    %23 = vector.broadcast %22 : vector<1x32xf32> to vector<8x32xf32>
    %24 = vector.extract_strided_slice %10 {offsets = [0, 0], sizes = [8, 8], strides = [1, 1]} : vector<8x32xf32> to vector<8x8xf32>
    %25 = vector.extract_strided_slice %15 {offsets = [0, 0], sizes = [8, 8], strides = [1, 1]} : vector<8x32xf32> to vector<8x8xf32>
    %cst_24 = arith.constant dense<0.000000e+00> : vector<8x8xf32>
    %26 = tpu.matmul %24, %25, %cst_24 {dimension_numbers = #tpu.dot_dimension_numbers<[1], [1], [0], [0], [0, 0, 1, 0], [], []>} : vector<8x8xf32>, vector<8x8xf32>, vector<8x8xf32> -> vector<8x8xf32>
    %cst_25 = arith.constant dense<0xFF800000> : vector<8xf32>
    %27 = vector.multi_reduction <maximumf>, %26, %cst_25 [1] : vector<8x8xf32> to vector<8xf32>
    %28 = vector.shape_cast %27 : vector<8xf32> to vector<8x1xf32>
    %29 = vector.broadcast %28 : vector<8x1xf32> to vector<8x8xf32>
    %30 = arith.subf %26, %29 : vector<8x8xf32>
    %31 = math.exp %30 : vector<8x8xf32>
    %cst_26 = arith.constant dense<0.000000e+00> : vector<8xf32>
    %32 = vector.multi_reduction <add>, %31, %cst_26 [1] : vector<8x8xf32> to vector<8xf32>
    %33 = vector.shape_cast %32 : vector<8xf32> to vector<8x1xf32>
    %34 = vector.extract_strided_slice %20 {offsets = [0, 0], sizes = [8, 8], strides = [1, 1]} : vector<8x32xf32> to vector<8x8xf32>
    %cst_27 = arith.constant dense<0.000000e+00> : vector<8x8xf32>
    %35 = tpu.matmul %31, %34, %cst_27 {dimension_numbers = #tpu.dot_dimension_numbers<[1], [0], [0], [1], [0, 0, 1, 1], [], []>} : vector<8x8xf32>, vector<8x8xf32>, vector<8x8xf32> -> vector<8x8xf32>
    %36 = vector.broadcast %33 : vector<8x1xf32> to vector<8x8xf32>
    %37 = arith.divf %35, %36 : vector<8x8xf32>
    %c0_28 = arith.constant 0 : index
    %c0_29 = arith.constant 0 : index
    %38 = vector.load %arg7[%c0_28, %c0_29] : memref<32x32xf32, #tpu.memory_space<vmem>>, vector<32x8xf32>
    %cst_30 = arith.constant dense<0.000000e+00> : vector<8x32xf32>
    %39 = tpu.matmul %37, %38, %cst_30 {dimension_numbers = #tpu.dot_dimension_numbers<[1], [1], [0], [0], [0, 0, 1, 0], [], []>} : vector<8x8xf32>, vector<32x8xf32>, vector<8x32xf32> -> vector<8x32xf32>
    %40 = arith.addf %23, %39 : vector<8x32xf32>
    %41 = vector.extract_strided_slice %10 {offsets = [0, 8], sizes = [8, 8], strides = [1, 1]} : vector<8x32xf32> to vector<8x8xf32>
    %42 = vector.extract_strided_slice %15 {offsets = [0, 8], sizes = [8, 8], strides = [1, 1]} : vector<8x32xf32> to vector<8x8xf32>
    %cst_31 = arith.constant dense<0.000000e+00> : vector<8x8xf32>
    %43 = tpu.matmul %41, %42, %cst_31 {dimension_numbers = #tpu.dot_dimension_numbers<[1], [1], [0], [0], [0, 0, 1, 0], [], []>} : vector<8x8xf32>, vector<8x8xf32>, vector<8x8xf32> -> vector<8x8xf32>
    %cst_32 = arith.constant dense<0xFF800000> : vector<8xf32>
    %44 = vector.multi_reduction <maximumf>, %43, %cst_32 [1] : vector<8x8xf32> to vector<8xf32>
    %45 = vector.shape_cast %44 : vector<8xf32> to vector<8x1xf32>
    %46 = vector.broadcast %45 : vector<8x1xf32> to vector<8x8xf32>
    %47 = arith.subf %43, %46 : vector<8x8xf32>
    %48 = math.exp %47 : vector<8x8xf32>
    %cst_33 = arith.constant dense<0.000000e+00> : vector<8xf32>
    %49 = vector.multi_reduction <add>, %48, %cst_33 [1] : vector<8x8xf32> to vector<8xf32>
    %50 = vector.shape_cast %49 : vector<8xf32> to vector<8x1xf32>
    %51 = vector.extract_strided_slice %20 {offsets = [0, 8], sizes = [8, 8], strides = [1, 1]} : vector<8x32xf32> to vector<8x8xf32>
    %cst_34 = arith.constant dense<0.000000e+00> : vector<8x8xf32>
    %52 = tpu.matmul %48, %51, %cst_34 {dimension_numbers = #tpu.dot_dimension_numbers<[1], [0], [0], [1], [0, 0, 1, 1], [], []>} : vector<8x8xf32>, vector<8x8xf32>, vector<8x8xf32> -> vector<8x8xf32>
    %53 = vector.broadcast %50 : vector<8x1xf32> to vector<8x8xf32>
    %54 = arith.divf %52, %53 : vector<8x8xf32>
    %c0_35 = arith.constant 0 : index
    %c8 = arith.constant 8 : index
    %55 = vector.load %arg7[%c0_35, %c8] : memref<32x32xf32, #tpu.memory_space<vmem>>, vector<32x8xf32>
    %cst_36 = arith.constant dense<0.000000e+00> : vector<8x32xf32>
    %56 = tpu.matmul %54, %55, %cst_36 {dimension_numbers = #tpu.dot_dimension_numbers<[1], [1], [0], [0], [0, 0, 1, 0], [], []>} : vector<8x8xf32>, vector<32x8xf32>, vector<8x32xf32> -> vector<8x32xf32>
    %57 = arith.addf %40, %56 : vector<8x32xf32>
    %58 = vector.extract_strided_slice %10 {offsets = [0, 16], sizes = [8, 8], strides = [1, 1]} : vector<8x32xf32> to vector<8x8xf32>
    %59 = vector.extract_strided_slice %15 {offsets = [0, 16], sizes = [8, 8], strides = [1, 1]} : vector<8x32xf32> to vector<8x8xf32>
    %cst_37 = arith.constant dense<0.000000e+00> : vector<8x8xf32>
    %60 = tpu.matmul %58, %59, %cst_37 {dimension_numbers = #tpu.dot_dimension_numbers<[1], [1], [0], [0], [0, 0, 1, 0], [], []>} : vector<8x8xf32>, vector<8x8xf32>, vector<8x8xf32> -> vector<8x8xf32>
    %cst_38 = arith.constant dense<0xFF800000> : vector<8xf32>
    %61 = vector.multi_reduction <maximumf>, %60, %cst_38 [1] : vector<8x8xf32> to vector<8xf32>
    %62 = vector.shape_cast %61 : vector<8xf32> to vector<8x1xf32>
    %63 = vector.broadcast %62 : vector<8x1xf32> to vector<8x8xf32>
    %64 = arith.subf %60, %63 : vector<8x8xf32>
    %65 = math.exp %64 : vector<8x8xf32>
    %cst_39 = arith.constant dense<0.000000e+00> : vector<8xf32>
    %66 = vector.multi_reduction <add>, %65, %cst_39 [1] : vector<8x8xf32> to vector<8xf32>
    %67 = vector.shape_cast %66 : vector<8xf32> to vector<8x1xf32>
    %68 = vector.extract_strided_slice %20 {offsets = [0, 16], sizes = [8, 8], strides = [1, 1]} : vector<8x32xf32> to vector<8x8xf32>
    %cst_40 = arith.constant dense<0.000000e+00> : vector<8x8xf32>
    %69 = tpu.matmul %65, %68, %cst_40 {dimension_numbers = #tpu.dot_dimension_numbers<[1], [0], [0], [1], [0, 0, 1, 1], [], []>} : vector<8x8xf32>, vector<8x8xf32>, vector<8x8xf32> -> vector<8x8xf32>
    %70 = vector.broadcast %67 : vector<8x1xf32> to vector<8x8xf32>
    %71 = arith.divf %69, %70 : vector<8x8xf32>
    %c0_41 = arith.constant 0 : index
    %c16 = arith.constant 16 : index
    %72 = vector.load %arg7[%c0_41, %c16] : memref<32x32xf32, #tpu.memory_space<vmem>>, vector<32x8xf32>
    %cst_42 = arith.constant dense<0.000000e+00> : vector<8x32xf32>
    %73 = tpu.matmul %71, %72, %cst_42 {dimension_numbers = #tpu.dot_dimension_numbers<[1], [1], [0], [0], [0, 0, 1, 0], [], []>} : vector<8x8xf32>, vector<32x8xf32>, vector<8x32xf32> -> vector<8x32xf32>
    %74 = arith.addf %57, %73 : vector<8x32xf32>
    %75 = vector.extract_strided_slice %10 {offsets = [0, 24], sizes = [8, 8], strides = [1, 1]} : vector<8x32xf32> to vector<8x8xf32>
    %76 = vector.extract_strided_slice %15 {offsets = [0, 24], sizes = [8, 8], strides = [1, 1]} : vector<8x32xf32> to vector<8x8xf32>
    %cst_43 = arith.constant dense<0.000000e+00> : vector<8x8xf32>
    %77 = tpu.matmul %75, %76, %cst_43 {dimension_numbers = #tpu.dot_dimension_numbers<[1], [1], [0], [0], [0, 0, 1, 0], [], []>} : vector<8x8xf32>, vector<8x8xf32>, vector<8x8xf32> -> vector<8x8xf32>
    %cst_44 = arith.constant dense<0xFF800000> : vector<8xf32>
    %78 = vector.multi_reduction <maximumf>, %77, %cst_44 [1] : vector<8x8xf32> to vector<8xf32>
    %79 = vector.shape_cast %78 : vector<8xf32> to vector<8x1xf32>
    %80 = vector.broadcast %79 : vector<8x1xf32> to vector<8x8xf32>
    %81 = arith.subf %77, %80 : vector<8x8xf32>
    %82 = math.exp %81 : vector<8x8xf32>
    %cst_45 = arith.constant dense<0.000000e+00> : vector<8xf32>
    %83 = vector.multi_reduction <add>, %82, %cst_45 [1] : vector<8x8xf32> to vector<8xf32>
    %84 = vector.shape_cast %83 : vector<8xf32> to vector<8x1xf32>
    %85 = vector.extract_strided_slice %20 {offsets = [0, 24], sizes = [8, 8], strides = [1, 1]} : vector<8x32xf32> to vector<8x8xf32>
    %cst_46 = arith.constant dense<0.000000e+00> : vector<8x8xf32>
    %86 = tpu.matmul %82, %85, %cst_46 {dimension_numbers = #tpu.dot_dimension_numbers<[1], [0], [0], [1], [0, 0, 1, 1], [], []>} : vector<8x8xf32>, vector<8x8xf32>, vector<8x8xf32> -> vector<8x8xf32>
    %87 = vector.broadcast %84 : vector<8x1xf32> to vector<8x8xf32>
    %88 = arith.divf %86, %87 : vector<8x8xf32>
    %c0_47 = arith.constant 0 : index
    %c24 = arith.constant 24 : index
    %89 = vector.load %arg7[%c0_47, %c24] : memref<32x32xf32, #tpu.memory_space<vmem>>, vector<32x8xf32>
    %cst_48 = arith.constant dense<0.000000e+00> : vector<8x32xf32>
    %90 = tpu.matmul %88, %89, %cst_48 {dimension_numbers = #tpu.dot_dimension_numbers<[1], [1], [0], [0], [0, 0, 1, 0], [], []>} : vector<8x8xf32>, vector<32x8xf32>, vector<8x32xf32> -> vector<8x32xf32>
    %91 = arith.addf %74, %90 : vector<8x32xf32>
    %c0_49 = arith.constant 0 : index
    %c0_50 = arith.constant 0 : index
    %c0_51 = arith.constant 0 : index
    %92 = vector.load %arg12[%c0_49, %c0_50, %c0_51] : memref<1x8x32xf32, #tpu.memory_space<vmem>>, vector<1x8x32xf32>
    %93 = vector.shape_cast %92 : vector<1x8x32xf32> to vector<8x32xf32>
    %94 = vector.shape_cast %91 : vector<8x32xf32> to vector<1x8x32xf32>
    tpu.vector_store %arg12[%c0_49, %c0_50, %c0_51], %94 {strides = array<i32>} : memref<1x8x32xf32, #tpu.memory_space<vmem>>, vector<1x8x32xf32>,
    return
  }
  func.func @transform_0(%arg0: i32) -> (i32, i32, i32) {
    %c0_i32 = arith.constant 0 : i32
    %c0_i32_0 = arith.constant 0 : i32
    %c0_i32_1 = arith.constant 0 : i32
    return %arg0, %c0_i32, %c0_i32_0 : i32, i32, i32
  }
  func.func @transform_1(%arg0: i32) -> (i32, i32, i32) {
    %c0_i32 = arith.constant 0 : i32
    %c0_i32_0 = arith.constant 0 : i32
    %c0_i32_1 = arith.constant 0 : i32
    return %arg0, %c0_i32, %c0_i32_0 : i32, i32, i32
  }
  func.func @transform_2(%arg0: i32) -> (i32, i32, i32) {
    %c0_i32 = arith.constant 0 : i32
    %c0_i32_0 = arith.constant 0 : i32
    %c0_i32_1 = arith.constant 0 : i32
    return %arg0, %c0_i32, %c0_i32_0 : i32, i32, i32
  }
  func.func @transform_3(%arg0: i32) -> (i32, i32) {
    %c0_i32 = arith.constant 0 : i32
    %c0_i32_0 = arith.constant 0 : i32
    %c0_i32_1 = arith.constant 0 : i32
    return %c0_i32, %c0_i32_0 : i32, i32
  }
  func.func @transform_4(%arg0: i32) -> (i32, i32) {
    %c0_i32 = arith.constant 0 : i32
    %c0_i32_0 = arith.constant 0 : i32
    %c0_i32_1 = arith.constant 0 : i32
    return %c0_i32, %c0_i32_0 : i32, i32
  }
  func.func @transform_5(%arg0: i32) -> (i32, i32) {
    %c0_i32 = arith.constant 0 : i32
    %c0_i32_0 = arith.constant 0 : i32
    %c0_i32_1 = arith.constant 0 : i32
    return %c0_i32, %c0_i32_0 : i32, i32
  }
  func.func @transform_6(%arg0: i32) -> (i32, i32) {
    %c0_i32 = arith.constant 0 : i32
    %c0_i32_0 = arith.constant 0 : i32
    %c0_i32_1 = arith.constant 0 : i32
    return %c0_i32, %c0_i32_0 : i32, i32
  }
  func.func @transform_7(%arg0: i32) -> (i32, i32) {
    %c0_i32 = arith.constant 0 : i32
    %c0_i32_0 = arith.constant 0 : i32
    %c0_i32_1 = arith.constant 0 : i32
    return %c0_i32, %c0_i32_0 : i32, i32
  }
  func.func @transform_8(%arg0: i32) -> (i32, i32) {
    %c0_i32 = arith.constant 0 : i32
    %c0_i32_0 = arith.constant 0 : i32
    %c0_i32_1 = arith.constant 0 : i32
    return %c0_i32, %c0_i32_0 : i32, i32
  }
  func.func @transform_9(%arg0: i32) -> (i32, i32) {
    %c0_i32 = arith.constant 0 : i32
    %c0_i32_0 = arith.constant 0 : i32
    %c0_i32_1 = arith.constant 0 : i32
    return %c0_i32, %c0_i32_0 : i32, i32
  }
  func.func @transform_10(%arg0: i32) -> (i32, i32) {
    %c0_i32 = arith.constant 0 : i32
    %c0_i32_0 = arith.constant 0 : i32
    %c0_i32_1 = arith.constant 0 : i32
    return %c0_i32, %c0_i32_0 : i32, i32
  }
  func.func @transform_11(%arg0: i32) -> (i32, i32, i32) {
    %c0_i32 = arith.constant 0 : i32
    %c0_i32_0 = arith.constant 0 : i32
    %c0_i32_1 = arith.constant 0 : i32
    return %arg0, %c0_i32, %c0_i32_0 : i32, i32, i32
  }
}

</mosaic_0001>

<llo_original>
// kernel: cross_attention.1
$region0: #{cross_attention.1}
  #allocation0 [shape = 'u32[]', space=smem, size = 0x4, offset = 0x4, fixed_abs, tag = 'smem constant byte address 0x4 - core index']
  #allocation1 [shape = 'u32[144,128]{1,0:T(1,128)}', space=vmem, size = 0x12000, scoped, tag = 'internal scratch']
  %s0 = inlined_call_operand.vmem [shape: f32[2,8,32], index: 0, kind: input, shape index: {}]
  %s1 = inlined_call_operand.vmem [shape: f32[2,8,32], index: 1, kind: input, shape index: {}]
  %s2 = inlined_call_operand.vmem [shape: f32[2,8,32], index: 2, kind: input, shape index: {}]
  %s3 = inlined_call_operand.vmem [shape: f32[32,32], index: 3, kind: input, shape index: {}]
  %s4 = inlined_call_operand.vmem [shape: f32[32,32], index: 4, kind: input, shape index: {}]
  %s5 = inlined_call_operand.vmem [shape: f32[32,32], index: 5, kind: input, shape index: {}]
  %s6 = inlined_call_operand.vmem [shape: f32[32,32], index: 6, kind: input, shape index: {}]
  %s7 = inlined_call_operand.vmem [shape: f32[1,32], index: 7, kind: input, shape index: {}]
  %s8 = inlined_call_operand.vmem [shape: f32[1,32], index: 8, kind: input, shape index: {}]
  %s9 = inlined_call_operand.vmem [shape: f32[1,32], index: 9, kind: input, shape index: {}]
  %s10 = inlined_call_operand.vmem [shape: f32[1,32], index: 10, kind: input, shape index: {}]
  %s11 = inlined_call_operand.hbm [shape: f32[2,8,32], index: 11, kind: output, shape index: {}]
  %s12 = sld [smem:[#allocation0]]
  $region77: #{cross_attention.1} parent=0
    _
  %s14 = ssub.s32 1, %s12
  %s15 = scalar_select 0, %s14, %s12
  $region1: #{cross_attention.1} parent=0
    #allocation2 [shape = 'u8[8192]{0}', space=vmem, size = 0x2000, scoped, tag = 'output window, operand 0']
    #allocation3 [shape = 's32[2]{0}', space=sflag, size = 0x8, scoped, tag = 'scoped memory for cross_attention.1']
    %16 = vsyncpa [#allocation3], 0
    %s17 = scalar_lea.sflag [#allocation3], 1
    %18 = vsyncpa %s17, 0
    loop: start=0, step=1, limit=4
    $region2: #{cross_attention.1} parent=1 // loop_pre_header
      _
    $region3: #{cross_attention.1} parent=1 // loop_header
      %s20 = sphi 0, %s24
      %p21 = scmp.ge.s32.totalorder %s20, 4
      %s30 = sphi 0, %s32
      %s33 = sphi 0, %s30
      %s34 = sphi 0, %s33
      %s50 = sphi 0, %s34
      %s56 = sphi 0, %s58
      %s59 = sphi 0, %s56
      %s60 = sphi 0, %s59
      %s76 = sphi 0, %s60
      %s82 = sphi 0, %s84
      %s85 = sphi 0, %s82
      %s86 = sphi 0, %s85
      %s102 = sphi 0, %s86
      %s106 = sphi 0, %s106
      %s108 = sphi 0, %s106
      %s109 = sphi 0, %s108
      %s123 = sphi 0, %s109
      %s127 = sphi 0, %s127
      %s129 = sphi 0, %s127
      %s130 = sphi 0, %s129
      %s144 = sphi 0, %s130
      %s148 = sphi 0, %s148
      %s150 = sphi 0, %s148
      %s151 = sphi 0, %s150
      %s165 = sphi 0, %s151
      %s169 = sphi 0, %s169
      %s171 = sphi 0, %s169
      %s172 = sphi 0, %s171
      %s186 = sphi 0, %s172
      %s190 = sphi 0, %s190
      %s192 = sphi 0, %s190
      %s193 = sphi 0, %s192
      %s207 = sphi 0, %s193
      %s211 = sphi 0, %s211
      %s213 = sphi 0, %s211
      %s214 = sphi 0, %s213
      %s228 = sphi 0, %s214
      %s232 = sphi 0, %s232
      %s234 = sphi 0, %s232
      %s235 = sphi 0, %s234
      %s249 = sphi 0, %s235
      %s253 = sphi 0, %s253
      %s255 = sphi 0, %s253
      %s256 = sphi 0, %s255
      %s270 = sphi 0, %s256
      %s276 = sphi 0, %s278
      %s279 = sphi 0, %s276
      %s280 = sphi 0, %s279
      %s296 = sphi 0, %s280
    $region4: #{cross_attention.1} parent=1 // loop_header_branch
      %23 = sbr.rel (%p21) target = $region8
    $region5: #{cross_attention.1} parent=1 // loop_body
      %s25 = ssub.s32 %s20, 1
      %s26 = ssub.s32 %s20, 2
      %s27 = sadd.s32 %s20, 1
      %s28 = ssub.s32 %s20, %s27
      %p29 = scmp.eq.s32.totalorder %s28, 0
      %s31 = sadd.s32 %s30, 1
      %s32 = scalar_select %p29, %s30, %s31
      %p35 = pneg %p29
      %p36 = scmp.eq.s32.totalorder %s20, 1
      %p37 = por %p35, %p36
      %p38 = scmp.ne.s32.totalorder %s30, %s33
      %p39 = scmp.eq.s32.totalorder %s20, 0
      %p40 = por %p38, %p39
      %p41 = scmp.ne.s32.totalorder %s30, %s33
      %p42 = scmp.eq.s32.totalorder %s25, 1
      %p43 = por %p41, %p42
      %p44 = scmp.ne.s32.totalorder %s33, %s34
      %p45 = scmp.eq.s32.totalorder %s25, 0
      %p46 = por %p44, %p45
      %p47 = scmp.ne.s32.totalorder %s33, %s34
      %p48 = scmp.eq.s32.totalorder %s26, 1
      %p49 = por %p47, %p48
      %p51 = scmp.ne.s32.totalorder %s34, %s50
      %p52 = scmp.eq.s32.totalorder %s26, 0
      %p53 = por %p51, %p52
      %s54 = ssub.s32 %s20, %s27
      %p55 = scmp.eq.s32.totalorder %s54, 0
      %s57 = sadd.s32 %s56, 1
      %s58 = scalar_select %p55, %s56, %s57
      %p61 = pneg %p55
      %p62 = scmp.eq.s32.totalorder %s20, 1
      %p63 = por %p61, %p62
      %p64 = scmp.ne.s32.totalorder %s56, %s59
      %p65 = scmp.eq.s32.totalorder %s20, 0
      %p66 = por %p64, %p65
      %p67 = scmp.ne.s32.totalorder %s56, %s59
      %p68 = scmp.eq.s32.totalorder %s25, 1
      %p69 = por %p67, %p68
      %p70 = scmp.ne.s32.totalorder %s59, %s60
      %p71 = scmp.eq.s32.totalorder %s25, 0
      %p72 = por %p70, %p71
      %p73 = scmp.ne.s32.totalorder %s59, %s60
      %p74 = scmp.eq.s32.totalorder %s26, 1
      %p75 = por %p73, %p74
      %p77 = scmp.ne.s32.totalorder %s60, %s76
      %p78 = scmp.eq.s32.totalorder %s26, 0
      %p79 = por %p77, %p78
      %s80 = ssub.s32 %s20, %s27
      %p81 = scmp.eq.s32.totalorder %s80, 0
      %s83 = sadd.s32 %s82, 1
      %s84 = scalar_select %p81, %s82, %s83
      %p87 = pneg %p81
      %p88 = scmp.eq.s32.totalorder %s20, 1
      %p89 = por %p87, %p88
      %p90 = scmp.ne.s32.totalorder %s82, %s85
      %p91 = scmp.eq.s32.totalorder %s20, 0
      %p92 = por %p90, %p91
      %p93 = scmp.ne.s32.totalorder %s82, %s85
      %p94 = scmp.eq.s32.totalorder %s25, 1
      %p95 = por %p93, %p94
      %p96 = scmp.ne.s32.totalorder %s85, %s86
      %p97 = scmp.eq.s32.totalorder %s25, 0
      %p98 = por %p96, %p97
      %p99 = scmp.ne.s32.totalorder %s85, %s86
      %p100 = scmp.eq.s32.totalorder %s26, 1
      %p101 = por %p99, %p100
      %p103 = scmp.ne.s32.totalorder %s86, %s102
      %p104 = scmp.eq.s32.totalorder %s26, 0
      %p105 = por %p103, %p104
      %s107 = sadd.s32 %s106, 1
      %p110 = scmp.eq.s32.totalorder %s20, 1
      %p111 = scmp.ne.s32.totalorder %s106, %s108
      %p112 = scmp.eq.s32.totalorder %s20, 0
      %p113 = por %p111, %p112
      %p114 = scmp.ne.s32.totalorder %s106, %s108
      %p115 = scmp.eq.s32.totalorder %s25, 1
      %p116 = por %p114, %p115
      %p117 = scmp.ne.s32.totalorder %s108, %s109
      %p118 = scmp.eq.s32.totalorder %s25, 0
      %p119 = por %p117, %p118
      %p120 = scmp.ne.s32.totalorder %s108, %s109
      %p121 = scmp.eq.s32.totalorder %s26, 1
      %p122 = por %p120, %p121
      %p124 = scmp.ne.s32.totalorder %s109, %s123
      %p125 = scmp.eq.s32.totalorder %s26, 0
      %p126 = por %p124, %p125
      %s128 = sadd.s32 %s127, 1
      %p131 = scmp.eq.s32.totalorder %s20, 1
      %p132 = scmp.ne.s32.totalorder %s127, %s129
      %p133 = scmp.eq.s32.totalorder %s20, 0
      %p134 = por %p132, %p133
      %p135 = scmp.ne.s32.totalorder %s127, %s129
      %p136 = scmp.eq.s32.totalorder %s25, 1
      %p137 = por %p135, %p136
      %p138 = scmp.ne.s32.totalorder %s129, %s130
      %p139 = scmp.eq.s32.totalorder %s25, 0
      %p140 = por %p138, %p139
      %p141 = scmp.ne.s32.totalorder %s129, %s130
      %p142 = scmp.eq.s32.totalorder %s26, 1
      %p143 = por %p141, %p142
      %p145 = scmp.ne.s32.totalorder %s130, %s144
      %p146 = scmp.eq.s32.totalorder %s26, 0
      %p147 = por %p145, %p146
      %s149 = sadd.s32 %s148, 1
      %p152 = scmp.eq.s32.totalorder %s20, 1
      %p153 = scmp.ne.s32.totalorder %s148, %s150
      %p154 = scmp.eq.s32.totalorder %s20, 0
      %p155 = por %p153, %p154
      %p156 = scmp.ne.s32.totalorder %s148, %s150
      %p157 = scmp.eq.s32.totalorder %s25, 1
      %p158 = por %p156, %p157
      %p159 = scmp.ne.s32.totalorder %s150, %s151
      %p160 = scmp.eq.s32.totalorder %s25, 0
      %p161 = por %p159, %p160
      %p162 = scmp.ne.s32.totalorder %s150, %s151
      %p163 = scmp.eq.s32.totalorder %s26, 1
      %p164 = por %p162, %p163
      %p166 = scmp.ne.s32.totalorder %s151, %s165
      %p167 = scmp.eq.s32.totalorder %s26, 0
      %p168 = por %p166, %p167
      %s170 = sadd.s32 %s169, 1
      %p173 = scmp.eq.s32.totalorder %s20, 1
      %p174 = scmp.ne.s32.totalorder %s169, %s171
      %p175 = scmp.eq.s32.totalorder %s20, 0
      %p176 = por %p174, %p175
      %p177 = scmp.ne.s32.totalorder %s169, %s171
      %p178 = scmp.eq.s32.totalorder %s25, 1
      %p179 = por %p177, %p178
      %p180 = scmp.ne.s32.totalorder %s171, %s172
      %p181 = scmp.eq.s32.totalorder %s25, 0
      %p182 = por %p180, %p181
      %p183 = scmp.ne.s32.totalorder %s171, %s172
      %p184 = scmp.eq.s32.totalorder %s26, 1
      %p185 = por %p183, %p184
      %p187 = scmp.ne.s32.totalorder %s172, %s186
      %p188 = scmp.eq.s32.totalorder %s26, 0
      %p189 = por %p187, %p188
      %s191 = sadd.s32 %s190, 1
      %p194 = scmp.eq.s32.totalorder %s20, 1
      %p195 = scmp.ne.s32.totalorder %s190, %s192
      %p196 = scmp.eq.s32.totalorder %s20, 0
      %p197 = por %p195, %p196
      %p198 = scmp.ne.s32.totalorder %s190, %s192
      %p199 = scmp.eq.s32.totalorder %s25, 1
      %p200 = por %p198, %p199
      %p201 = scmp.ne.s32.totalorder %s192, %s193
      %p202 = scmp.eq.s32.totalorder %s25, 0
      %p203 = por %p201, %p202
      %p204 = scmp.ne.s32.totalorder %s192, %s193
      %p205 = scmp.eq.s32.totalorder %s26, 1
      %p206 = por %p204, %p205
      %p208 = scmp.ne.s32.totalorder %s193, %s207
      %p209 = scmp.eq.s32.totalorder %s26, 0
      %p210 = por %p208, %p209
      %s212 = sadd.s32 %s211, 1
      %p215 = scmp.eq.s32.totalorder %s20, 1
      %p216 = scmp.ne.s32.totalorder %s211, %s213
      %p217 = scmp.eq.s32.totalorder %s20, 0
      %p218 = por %p216, %p217
      %p219 = scmp.ne.s32.totalorder %s211, %s213
      %p220 = scmp.eq.s32.totalorder %s25, 1
      %p221 = por %p219, %p220
      %p222 = scmp.ne.s32.totalorder %s213, %s214
      %p223 = scmp.eq.s32.totalorder %s25, 0
      %p224 = por %p222, %p223
      %p225 = scmp.ne.s32.totalorder %s213, %s214
      %p226 = scmp.eq.s32.totalorder %s26, 1
      %p227 = por %p225, %p226
      %p229 = scmp.ne.s32.totalorder %s214, %s228
      %p230 = scmp.eq.s32.totalorder %s26, 0
      %p231 = por %p229, %p230
      %s233 = sadd.s32 %s232, 1
      %p236 = scmp.eq.s32.totalorder %s20, 1
      %p237 = scmp.ne.s32.totalorder %s232, %s234
      %p238 = scmp.eq.s32.totalorder %s20, 0
      %p239 = por %p237, %p238
      %p240 = scmp.ne.s32.totalorder %s232, %s234
      %p241 = scmp.eq.s32.totalorder %s25, 1
      %p242 = por %p240, %p241
      %p243 = scmp.ne.s32.totalorder %s234, %s235
      %p244 = scmp.eq.s32.totalorder %s25, 0
      %p245 = por %p243, %p244
      %p246 = scmp.ne.s32.totalorder %s234, %s235
      %p247 = scmp.eq.s32.totalorder %s26, 1
      %p248 = por %p246, %p247
      %p250 = scmp.ne.s32.totalorder %s235, %s249
      %p251 = scmp.eq.s32.totalorder %s26, 0
      %p252 = por %p250, %p251
      %s254 = sadd.s32 %s253, 1
      %p257 = scmp.eq.s32.totalorder %s20, 1
      %p258 = scmp.ne.s32.totalorder %s253, %s255
      %p259 = scmp.eq.s32.totalorder %s20, 0
      %p260 = por %p258, %p259
      %p261 = scmp.ne.s32.totalorder %s253, %s255
      %p262 = scmp.eq.s32.totalorder %s25, 1
      %p263 = por %p261, %p262
      %p264 = scmp.ne.s32.totalorder %s255, %s256
      %p265 = scmp.eq.s32.totalorder %s25, 0
      %p266 = por %p264, %p265
      %p267 = scmp.ne.s32.totalorder %s255, %s256
      %p268 = scmp.eq.s32.totalorder %s26, 1
      %p269 = por %p267, %p268
      %p271 = scmp.ne.s32.totalorder %s256, %s270
      %p272 = scmp.eq.s32.totalorder %s26, 0
      %p273 = por %p271, %p272
      %s274 = ssub.s32 %s20, %s27
      %p275 = scmp.eq.s32.totalorder %s274, 0
      %s277 = sadd.s32 %s276, 1
      %s278 = scalar_select %p275, %s276, %s277
      %p281 = pneg %p275
      %p282 = scmp.eq.s32.totalorder %s20, 1
      %p283 = por %p281, %p282
      %p284 = scmp.ne.s32.totalorder %s276, %s279
      %p285 = scmp.eq.s32.totalorder %s20, 0
      %p286 = por %p284, %p285
      %p287 = scmp.ne.s32.totalorder %s276, %s279
      %p288 = scmp.eq.s32.totalorder %s25, 1
      %p289 = por %p287, %p288
      %p290 = scmp.ne.s32.totalorder %s279, %s280
      %p291 = scmp.eq.s32.totalorder %s25, 0
      %p292 = por %p290, %p291
      %p293 = scmp.ne.s32.totalorder %s279, %s280
      %p294 = scmp.eq.s32.totalorder %s26, 1
      %p295 = por %p293, %p294
      %p297 = scmp.ne.s32.totalorder %s280, %s296
      %p298 = scmp.eq.s32.totalorder %s26, 0
      %p299 = por %p297, %p298
      %p300 = scmp.le.s32.totalorder 1, %s20
      %p301 = scmp.lt.s32.totalorder %s20, 3
      %p302 = pnand %p300, %p301
      %p303 = pneg %p302
      // Predicated region
      $region9: #{cross_attention.1} parent=5 // pred_check
        _
      $region10: #{cross_attention.1} parent=5 // pred_check_branch
        %305 = sbr.rel (%p302) target = $region12
      $region11: #{cross_attention.1} parent=5 // pred_region
        %s306 = ssub.s32 %s20, 1
        // Predicated region
        $region13: #{cross_attention.1} parent=11 // pred_check
          %p307 = pneg %p119
        $region14: #{cross_attention.1} parent=11 // pred_check_branch
          %309 = sbr.rel (%p307) target = $region16
        $region15: #{cross_attention.1} parent=11 // pred_region
          _
        $region16: #{cross_attention.1} parent=11 // pred_fallthru
          _
        // Predicated region
        $region17: #{cross_attention.1} parent=11 // pred_check
          %p310 = pneg %p140
        $region18: #{cross_attention.1} parent=11 // pred_check_branch
          %312 = sbr.rel (%p310) target = $region20
        $region19: #{cross_attention.1} parent=11 // pred_region
          _
        $region20: #{cross_attention.1} parent=11 // pred_fallthru
          _
        // Predicated region
        $region21: #{cross_attention.1} parent=11 // pred_check
          %p313 = pneg %p161
        $region22: #{cross_attention.1} parent=11 // pred_check_branch
          %315 = sbr.rel (%p313) target = $region24
        $region23: #{cross_attention.1} parent=11 // pred_region
          _
        $region24: #{cross_attention.1} parent=11 // pred_fallthru
          _
        // Predicated region
        $region25: #{cross_attention.1} parent=11 // pred_check
          %p316 = pneg %p182
        $region26: #{cross_attention.1} parent=11 // pred_check_branch
          %318 = sbr.rel (%p316) target = $region28
        $region27: #{cross_attention.1} parent=11 // pred_region
          _
        $region28: #{cross_attention.1} parent=11 // pred_fallthru
          _
        // Predicated region
        $region29: #{cross_attention.1} parent=11 // pred_check
          %p319 = pneg %p203
        $region30: #{cross_attention.1} parent=11 // pred_check_branch
          %321 = sbr.rel (%p319) target = $region32
        $region31: #{cross_attention.1} parent=11 // pred_region
          _
        $region32: #{cross_attention.1} parent=11 // pred_fallthru
          _
        // Predicated region
        $region33: #{cross_attention.1} parent=11 // pred_check
          %p322 = pneg %p224
        $region34: #{cross_attention.1} parent=11 // pred_check_branch
          %324 = sbr.rel (%p322) target = $region36
        $region35: #{cross_attention.1} parent=11 // pred_region
          _
        $region36: #{cross_attention.1} parent=11 // pred_fallthru
          _
        // Predicated region
        $region37: #{cross_attention.1} parent=11 // pred_check
          %p325 = pneg %p245
        $region38: #{cross_attention.1} parent=11 // pred_check_branch
          %327 = sbr.rel (%p325) target = $region40
        $region39: #{cross_attention.1} parent=11 // pred_region
          _
        $region40: #{cross_attention.1} parent=11 // pred_fallthru
          _
        // Predicated region
        $region41: #{cross_attention.1} parent=11 // pred_check
          %p328 = pneg %p266
        $region42: #{cross_attention.1} parent=11 // pred_check_branch
          %330 = sbr.rel (%p328) target = $region44
        $region43: #{cross_attention.1} parent=11 // pred_region
          _
        $region44: #{cross_attention.1} parent=11 // pred_fallthru
          _
      $region12: #{cross_attention.1} parent=5 // pred_fallthru
        _
      %p331 = scmp.lt.s32.totalorder %s20, 2
      // Predicated region
      $region45: #{cross_attention.1} parent=5 // pred_check
        %p332 = pneg %p331
      $region46: #{cross_attention.1} parent=5 // pred_check_branch
        %334 = sbr.rel (%p332) target = $region48
      $region47: #{cross_attention.1} parent=5 // pred_region
        // Predicated region
        $region49: #{cross_attention.1} parent=47 // pred_check
          %p335 = pneg %p40
        $region50: #{cross_attention.1} parent=47 // pred_check_branch
          %337 = sbr.rel (%p335) target = $region52
        $region51: #{cross_attention.1} parent=47 // pred_region
          %p338 = scmp.lt.s32.totalorder %s20, 1
          %s339 = scalar_select %p338, %s20, 1
          %s340 = smul.addr %s339, 8
          %s341 = scalar_lea.vmem %s0, %s340
        $region52: #{cross_attention.1} parent=47 // pred_fallthru
          _
        // Predicated region
        $region53: #{cross_attention.1} parent=47 // pred_check
          %p342 = pneg %p66
        $region54: #{cross_attention.1} parent=47 // pred_check_branch
          %344 = sbr.rel (%p342) target = $region56
        $region55: #{cross_attention.1} parent=47 // pred_region
          %p345 = scmp.lt.s32.totalorder %s20, 1
          %s346 = scalar_select %p345, %s20, 1
          %s347 = smul.addr %s346, 8
          %s348 = scalar_lea.vmem %s1, %s347
        $region56: #{cross_attention.1} parent=47 // pred_fallthru
          _
        // Predicated region
        $region57: #{cross_attention.1} parent=47 // pred_check
          %p349 = pneg %p92
        $region58: #{cross_attention.1} parent=47 // pred_check_branch
          %351 = sbr.rel (%p349) target = $region60
        $region59: #{cross_attention.1} parent=47 // pred_region
          %p352 = scmp.lt.s32.totalorder %s20, 1
          %s353 = scalar_select %p352, %s20, 1
          %s354 = smul.addr %s353, 8
          %s355 = scalar_lea.vmem %s2, %s354
        $region60: #{cross_attention.1} parent=47 // pred_fallthru
          _
      $region48: #{cross_attention.1} parent=5 // pred_fallthru
        _
      %p356 = scmp.le.s32.totalorder 1, %s20
      %p357 = scmp.lt.s32.totalorder %s20, 3
      %p358 = pnand %p356, %p357
      %p359 = pneg %p358
      // Predicated region
      $region61: #{cross_attention.1} parent=5 // pred_check
        _
      $region62: #{cross_attention.1} parent=5 // pred_check_branch
        %361 = sbr.rel (%p358) target = $region64
      $region63: #{cross_attention.1} parent=5 // pred_region
        %s362 = ssub.s32 %s20, 1
        %p363 = scmp.lt.s32.totalorder %s25, 1
        %s364 = scalar_select %p363, %s25, 1
        %s365 = smul.addr %s364, 8
        %s366 = scalar_lea.vmem %s0, %s365
        %p367 = pneg %p46
        %p368 = pneg %p43
        %p369 = scmp.lt.s32.totalorder %s25, 1
        %s370 = scalar_select %p369, %s25, 1
        %s371 = smul.addr %s370, 8
        %s372 = scalar_lea.vmem %s1, %s371
        %p373 = pneg %p72
        %p374 = pneg %p69
        %p375 = scmp.lt.s32.totalorder %s25, 1
        %s376 = scalar_select %p375, %s25, 1
        %s377 = smul.addr %s376, 8
        %s378 = scalar_lea.vmem %s2, %s377
        %p379 = pneg %p98
        %p380 = pneg %p95
        %p381 = pneg %p119
        %p382 = pneg %p116
        %p383 = pneg %p140
        %p384 = pneg %p137
        %p385 = pneg %p161
        %p386 = pneg %p158
        %p387 = pneg %p182
        %p388 = pneg %p179
        %p389 = pneg %p203
        %p390 = pneg %p200
        %p391 = pneg %p224
        %p392 = pneg %p221
        %p393 = pneg %p245
        %p394 = pneg %p242
        %p395 = pneg %p266
        %p396 = pneg %p263
        %p397 = pneg %p292
        %p398 = pneg %p289
        %s399 = sand.u32 %s279, 1
        %s400 = scalar_lea.sflag [#allocation3], %s399
        %s401 = sand.u32 %s279, 1
        %s402 = smul.addr %s401, 8
        %s403 = scalar_lea.vmem [#allocation2], %s402
        %p404 = scmp.lt.s32.totalorder %s25, 1
        %s405 = scalar_select %p404, %s25, 1
        %s406 = smul.addr %s405, 8
        %s407 = scalar_lea.vmem %s0, %s406
        %p408 = scmp.lt.s32.totalorder %s25, 1
        %s409 = scalar_select %p408, %s25, 1
        %s410 = smul.addr %s409, 8
        %s411 = scalar_lea.vmem %s1, %s410
        %p412 = scmp.lt.s32.totalorder %s25, 1
        %s413 = scalar_select %p412, %s25, 1
        %s414 = smul.addr %s413, 8
        %s415 = scalar_lea.vmem %s2, %s414
        %v416 = vld [vmem:[%s407] sm:$0xff]
        %v417 = vld [vmem:[%s411] sm:$0xff]
        %v418 = vld [vmem:[%s415] sm:$0xff]
        %v419 = vld [vmem:[%s3] sm:$0xff]
        %v420 = vld [vmem:[%s3 + $0x8] sm:$0xff]
        %v421 = vld [vmem:[%s3 + $0x10] sm:$0xff]
        %v422 = vld [vmem:[%s3 + $0x18] sm:$0xff]
        %v423 = vld [vmem:[%s7] sm:$0x1]
        %v425 = vlaneseq
        %v426 = vshrl.u32 %v425, 7
        %v427 = vsub.s32 0, %v426
        %v428 = vrot.slane %v423, %v427
        %vm430 = vcmask 261120
        %v432 = vsel %vm430, %v416, 0
        %v435 = vsel %vm430, %v419, 0
        %v438 = vsel %vm430, %v420, 0
        %v441 = vsel %vm430, %v421, 0
        %v444 = vsel %vm430, %v422, 0
        %446 = vmatprep.subr.mxu0 0.0
        %447 = vmatpush1.xpose.msra.mxu0 %v435
        %448 = vmatprep.subr.mxu0 0.0
        %449 = vmatpush1.xpose.msra.mxu0 %v438
        %450 = vmatprep.subr.mxu0 0.0
        %451 = vmatpush1.xpose.msra.mxu0 %v441
        %452 = vmatprep.subr.mxu0 0.0
        %453 = vmatpush1.xpose.msra.mxu0 %v444
        %454 = vmatprep.subr.mxu0 0.0
        %455 = vmatpush1.xpose.msra.mxu0 0.0
        %456 = vmatprep.subr.mxu0 0.0
        %457 = vmatpush1.xpose.msra.mxu0 0.0
        %458 = vmatprep.subr.mxu0 0.0
        %459 = vmatpush1.xpose.msra.mxu0 0.0
        %460 = vmatprep.subr.mxu0 0.0
        %461 = vmatpush1.xpose.msra.mxu0 0.0
        %462 = vmatprep.subr.mxu0 0.0
        %463 = vmatpush1.xpose.msra.mxu0 0.0
        %464 = vmatprep.subr.mxu0 0.0
        %465 = vmatpush1.xpose.msra.mxu0 0.0
        %466 = vmatprep.subr.mxu0 0.0
        %467 = vmatpush1.xpose.msra.mxu0 0.0
        %468 = vmatprep.subr.mxu0 0.0
        %469 = vmatpush1.xpose.msra.mxu0 0.0
        %470 = vmatprep.subr.mxu0 0.0
        %471 = vmatpush1.xpose.msra.mxu0 0.0
        %472 = vmatprep.subr.mxu0 0.0
        %473 = vmatpush1.xpose.msra.mxu0 0.0
        %474 = vmatprep.subr.mxu0 0.0
        %475 = vmatpush1.xpose.msra.mxu0 0.0
        %476 = vmatprep.subr.mxu0 0.0
        %477 = vmatpush1.xpose.msra.mxu0 0.0
        %478 = vmatprep.subr.mxu0 0.0
        %479 = vmatpush1.xpose.msra.mxu0 0.0
        %480 = vmatprep.subr.mxu0 0.0
        %481 = vmatpush1.xpose.msra.mxu0 0.0
        %482 = vmatprep.subr.mxu0 0.0
        %483 = vmatpush1.xpose.msra.mxu0 0.0
        %484 = vmatprep.subr.mxu0 0.0
        %485 = vmatpush1.xpose.msra.mxu0 0.0
        %486 = vmatprep.subr.mxu0 0.0
        %487 = vmatpush1.xpose.msra.mxu0 0.0
        %488 = vmatprep.subr.mxu0 0.0
        %489 = vmatpush1.xpose.msra.mxu0 0.0
        %490 = vmatprep.subr.mxu0 0.0
        %491 = vmatpush1.xpose.msra.mxu0 0.0
        %492 = vmatprep.subr.mxu0 0.0
        %493 = vmatpush1.xpose.msra.mxu0 0.0
        %494 = vmatprep.subr.mxu0 0.0
        %495 = vmatpush1.xpose.msra.mxu0 0.0
        %496 = vmatprep.subr.mxu0 0.0
        %497 = vmatpush1.xpose.msra.mxu0 0.0
        %498 = vmatprep.subr.mxu0 0.0
        %499 = vmatpush1.xpose.msra.mxu0 0.0
        %500 = vmatprep.subr.mxu0 0.0
        %501 = vmatpush1.xpose.msra.mxu0 0.0
        %502 = vmatprep.subr.mxu0 0.0
        %503 = vmatpush1.xpose.msra.mxu0 0.0
        %504 = vmatprep.subr.mxu0 0.0
        %505 = vmatpush1.xpose.msra.mxu0 0.0
        %506 = vmatprep.subr.mxu0 0.0
        %507 = vmatpush1.xpose.msra.mxu0 0.0
        %508 = vmatprep.subr.mxu0 0.0
        %509 = vmatpush1.xpose.msra.mxu0 0.0
        %510 = vmatprep.mubr.f32.mxu0 0.0
        %511 = vmatmul.mubr.f32.gmra.mrb[0].mxu0 %v432
        %v512 = vpop.f32.mrb[0].mxu0
        %v513 = vadd.f32 %v428, %v512
        %v514 = vpop.f32.mrb[0].mxu0
        %515 = vdwg.mxu0
        %v516 = vld [vmem:[%s4] sm:$0xff]
        %v517 = vld [vmem:[%s4 + $0x8] sm:$0xff]
        %v518 = vld [vmem:[%s4 + $0x10] sm:$0xff]
        %v519 = vld [vmem:[%s4 + $0x18] sm:$0xff]
        %v520 = vld [vmem:[%s8] sm:$0x1]
        %v522 = vlaneseq
        %v523 = vshrl.u32 %v522, 7
        %v524 = vsub.s32 0, %v523
        %v525 = vrot.slane %v520, %v524
        %v528 = vsel %vm430, %v417, 0
        %v531 = vsel %vm430, %v516, 0
        %v534 = vsel %vm430, %v517, 0
        %v537 = vsel %vm430, %v518, 0
        %v540 = vsel %vm430, %v519, 0
        %542 = vmatprep.subr.mxu0 0.0
        %543 = vmatpush1.xpose.msra.mxu0 %v531
        %544 = vmatprep.subr.mxu0 0.0
        %545 = vmatpush1.xpose.msra.mxu0 %v534
        %546 = vmatprep.subr.mxu0 0.0
        %547 = vmatpush1.xpose.msra.mxu0 %v537
        %548 = vmatprep.subr.mxu0 0.0
        %549 = vmatpush1.xpose.msra.mxu0 %v540
        %550 = vmatprep.subr.mxu0 0.0
        %551 = vmatpush1.xpose.msra.mxu0 0.0
        %552 = vmatprep.subr.mxu0 0.0
        %553 = vmatpush1.xpose.msra.mxu0 0.0
        %554 = vmatprep.subr.mxu0 0.0
        %555 = vmatpush1.xpose.msra.mxu0 0.0
        %556 = vmatprep.subr.mxu0 0.0
        %557 = vmatpush1.xpose.msra.mxu0 0.0
        %558 = vmatprep.subr.mxu0 0.0
        %559 = vmatpush1.xpose.msra.mxu0 0.0
        %560 = vmatprep.subr.mxu0 0.0
        %561 = vmatpush1.xpose.msra.mxu0 0.0
        %562 = vmatprep.subr.mxu0 0.0
        %563 = vmatpush1.xpose.msra.mxu0 0.0
        %564 = vmatprep.subr.mxu0 0.0
        %565 = vmatpush1.xpose.msra.mxu0 0.0
        %566 = vmatprep.subr.mxu0 0.0
        %567 = vmatpush1.xpose.msra.mxu0 0.0
        %568 = vmatprep.subr.mxu0 0.0
        %569 = vmatpush1.xpose.msra.mxu0 0.0
        %570 = vmatprep.subr.mxu0 0.0
        %571 = vmatpush1.xpose.msra.mxu0 0.0
        %572 = vmatprep.subr.mxu0 0.0
        %573 = vmatpush1.xpose.msra.mxu0 0.0
        %574 = vmatprep.subr.mxu0 0.0
        %575 = vmatpush1.xpose.msra.mxu0 0.0
        %576 = vmatprep.subr.mxu0 0.0
        %577 = vmatpush1.xpose.msra.mxu0 0.0
        %578 = vmatprep.subr.mxu0 0.0
        %579 = vmatpush1.xpose.msra.mxu0 0.0
        %580 = vmatprep.subr.mxu0 0.0
        %581 = vmatpush1.xpose.msra.mxu0 0.0
        %582 = vmatprep.subr.mxu0 0.0
        %583 = vmatpush1.xpose.msra.mxu0 0.0
        %584 = vmatprep.subr.mxu0 0.0
        %585 = vmatpush1.xpose.msra.mxu0 0.0
        %586 = vmatprep.subr.mxu0 0.0
        %587 = vmatpush1.xpose.msra.mxu0 0.0
        %588 = vmatprep.subr.mxu0 0.0
        %589 = vmatpush1.xpose.msra.mxu0 0.0
        %590 = vmatprep.subr.mxu0 0.0
        %591 = vmatpush1.xpose.msra.mxu0 0.0
        %592 = vmatprep.subr.mxu0 0.0
        %593 = vmatpush1.xpose.msra.mxu0 0.0
        %594 = vmatprep.subr.mxu0 0.0
        %595 = vmatpush1.xpose.msra.mxu0 0.0
        %596 = vmatprep.subr.mxu0 0.0
        %597 = vmatpush1.xpose.msra.mxu0 0.0
        %598 = vmatprep.subr.mxu0 0.0
        %599 = vmatpush1.xpose.msra.mxu0 0.0
        %600 = vmatprep.subr.mxu0 0.0
        %601 = vmatpush1.xpose.msra.mxu0 0.0
        %602 = vmatprep.subr.mxu0 0.0
        %603 = vmatpush1.xpose.msra.mxu0 0.0
        %604 = vmatprep.subr.mxu0 0.0
        %605 = vmatpush1.xpose.msra.mxu0 0.0
        %606 = vmatprep.mubr.f32.mxu0 0.0
        %607 = vmatmul.mubr.f32.gmra.mrb[0].mxu0 %v528
        %v608 = vpop.f32.mrb[0].mxu0
        %v609 = vadd.f32 %v525, %v608
        %v610 = vpop.f32.mrb[0].mxu0
        %611 = vdwg.mxu0
        %v612 = vld [vmem:[%s5] sm:$0xff]
        %v613 = vld [vmem:[%s5 + $0x8] sm:$0xff]
        %v614 = vld [vmem:[%s5 + $0x10] sm:$0xff]
        %v615 = vld [vmem:[%s5 + $0x18] sm:$0xff]
        %v616 = vld [vmem:[%s9] sm:$0x1]
        %v618 = vlaneseq
        %v619 = vshrl.u32 %v618, 7
        %v620 = vsub.s32 0, %v619
        %v621 = vrot.slane %v616, %v620
        %v624 = vsel %vm430, %v418, 0
        %v627 = vsel %vm430, %v612, 0
        %v630 = vsel %vm430, %v613, 0
        %v633 = vsel %vm430, %v614, 0
        %v636 = vsel %vm430, %v615, 0
        %638 = vmatprep.subr.mxu0 0.0
        %639 = vmatpush1.xpose.msra.mxu0 %v627
        %640 = vmatprep.subr.mxu0 0.0
        %641 = vmatpush1.xpose.msra.mxu0 %v630
        %642 = vmatprep.subr.mxu0 0.0
        %643 = vmatpush1.xpose.msra.mxu0 %v633
        %644 = vmatprep.subr.mxu0 0.0
        %645 = vmatpush1.xpose.msra.mxu0 %v636
        %646 = vmatprep.subr.mxu0 0.0
        %647 = vmatpush1.xpose.msra.mxu0 0.0
        %648 = vmatprep.subr.mxu0 0.0
        %649 = vmatpush1.xpose.msra.mxu0 0.0
        %650 = vmatprep.subr.mxu0 0.0
        %651 = vmatpush1.xpose.msra.mxu0 0.0
        %652 = vmatprep.subr.mxu0 0.0
        %653 = vmatpush1.xpose.msra.mxu0 0.0
        %654 = vmatprep.subr.mxu0 0.0
        %655 = vmatpush1.xpose.msra.mxu0 0.0
        %656 = vmatprep.subr.mxu0 0.0
        %657 = vmatpush1.xpose.msra.mxu0 0.0
        %658 = vmatprep.subr.mxu0 0.0
        %659 = vmatpush1.xpose.msra.mxu0 0.0
        %660 = vmatprep.subr.mxu0 0.0
        %661 = vmatpush1.xpose.msra.mxu0 0.0
        %662 = vmatprep.subr.mxu0 0.0
        %663 = vmatpush1.xpose.msra.mxu0 0.0
        %664 = vmatprep.subr.mxu0 0.0
        %665 = vmatpush1.xpose.msra.mxu0 0.0
        %666 = vmatprep.subr.mxu0 0.0
        %667 = vmatpush1.xpose.msra.mxu0 0.0
        %668 = vmatprep.subr.mxu0 0.0
        %669 = vmatpush1.xpose.msra.mxu0 0.0
        %670 = vmatprep.subr.mxu0 0.0
        %671 = vmatpush1.xpose.msra.mxu0 0.0
        %672 = vmatprep.subr.mxu0 0.0
        %673 = vmatpush1.xpose.msra.mxu0 0.0
        %674 = vmatprep.subr.mxu0 0.0
        %675 = vmatpush1.xpose.msra.mxu0 0.0
        %676 = vmatprep.subr.mxu0 0.0
        %677 = vmatpush1.xpose.msra.mxu0 0.0
        %678 = vmatprep.subr.mxu0 0.0
        %679 = vmatpush1.xpose.msra.mxu0 0.0
        %680 = vmatprep.subr.mxu0 0.0
        %681 = vmatpush1.xpose.msra.mxu0 0.0
        %682 = vmatprep.subr.mxu0 0.0
        %683 = vmatpush1.xpose.msra.mxu0 0.0
        %684 = vmatprep.subr.mxu0 0.0
        %685 = vmatpush1.xpose.msra.mxu0 0.0
        %686 = vmatprep.subr.mxu0 0.0
        %687 = vmatpush1.xpose.msra.mxu0 0.0
        %688 = vmatprep.subr.mxu0 0.0
        %689 = vmatpush1.xpose.msra.mxu0 0.0
        %690 = vmatprep.subr.mxu0 0.0
        %691 = vmatpush1.xpose.msra.mxu0 0.0
        %692 = vmatprep.subr.mxu0 0.0
        %693 = vmatpush1.xpose.msra.mxu0 0.0
        %694 = vmatprep.subr.mxu0 0.0
        %695 = vmatpush1.xpose.msra.mxu0 0.0
        %696 = vmatprep.subr.mxu0 0.0
        %697 = vmatpush1.xpose.msra.mxu0 0.0
        %698 = vmatprep.subr.mxu0 0.0
        %699 = vmatpush1.xpose.msra.mxu0 0.0
        %700 = vmatprep.subr.mxu0 0.0
        %701 = vmatpush1.xpose.msra.mxu0 0.0
        %702 = vmatprep.mubr.f32.mxu0 0.0
        %703 = vmatmul.mubr.f32.gmra.mrb[0].mxu0 %v624
        %v704 = vpop.f32.mrb[0].mxu0
        %v705 = vadd.f32 %v621, %v704
        %v706 = vpop.f32.mrb[0].mxu0
        %707 = vdwg.mxu0
        %v708 = vld [vmem:[%s10] sm:$0x1]
        %v710 = vlaneseq
        %v711 = vshrl.u32 %v710, 7
        %v712 = vsub.s32 0, %v711
        %v713 = vrot.slane %v708, %v712
        %vm715 = vcmask 64512
        %v717 = vsel %vm715, %v513, 0
        %v720 = vsel %vm715, %v609, 0
        %722 = vmatprep.subr.mxu0 0.0
        %723 = vmatpush1.xpose.msra.mxu0 %v720
        %724 = vmatprep.subr.mxu0 0.0
        %725 = vmatpush1.xpose.msra.mxu0 0.0
        %726 = vmatprep.subr.mxu0 0.0
        %727 = vmatpush1.xpose.msra.mxu0 0.0
        %728 = vmatprep.subr.mxu0 0.0
        %729 = vmatpush1.xpose.msra.mxu0 0.0
        %730 = vmatprep.subr.mxu0 0.0
        %731 = vmatpush1.xpose.msra.mxu0 0.0
        %732 = vmatprep.subr.mxu0 0.0
        %733 = vmatpush1.xpose.msra.mxu0 0.0
        %734 = vmatprep.subr.mxu0 0.0
        %735 = vmatpush1.xpose.msra.mxu0 0.0
        %736 = vmatprep.subr.mxu0 0.0
        %737 = vmatpush1.xpose.msra.mxu0 0.0
        %738 = vmatprep.subr.mxu0 0.0
        %739 = vmatpush1.xpose.msra.mxu0 0.0
        %740 = vmatprep.subr.mxu0 0.0
        %741 = vmatpush1.xpose.msra.mxu0 0.0
        %742 = vmatprep.subr.mxu0 0.0
        %743 = vmatpush1.xpose.msra.mxu0 0.0
        %744 = vmatprep.subr.mxu0 0.0
        %745 = vmatpush1.xpose.msra.mxu0 0.0
        %746 = vmatprep.subr.mxu0 0.0
        %747 = vmatpush1.xpose.msra.mxu0 0.0
        %748 = vmatprep.subr.mxu0 0.0
        %749 = vmatpush1.xpose.msra.mxu0 0.0
        %750 = vmatprep.subr.mxu0 0.0
        %751 = vmatpush1.xpose.msra.mxu0 0.0
        %752 = vmatprep.subr.mxu0 0.0
        %753 = vmatpush1.xpose.msra.mxu0 0.0
        %754 = vmatprep.subr.mxu0 0.0
        %755 = vmatpush1.xpose.msra.mxu0 0.0
        %756 = vmatprep.subr.mxu0 0.0
        %757 = vmatpush1.xpose.msra.mxu0 0.0
        %758 = vmatprep.subr.mxu0 0.0
        %759 = vmatpush1.xpose.msra.mxu0 0.0
        %760 = vmatprep.subr.mxu0 0.0
        %761 = vmatpush1.xpose.msra.mxu0 0.0
        %762 = vmatprep.subr.mxu0 0.0
        %763 = vmatpush1.xpose.msra.mxu0 0.0
        %764 = vmatprep.subr.mxu0 0.0
        %765 = vmatpush1.xpose.msra.mxu0 0.0
        %766 = vmatprep.subr.mxu0 0.0
        %767 = vmatpush1.xpose.msra.mxu0 0.0
        %768 = vmatprep.subr.mxu0 0.0
        %769 = vmatpush1.xpose.msra.mxu0 0.0
        %770 = vmatprep.subr.mxu0 0.0
        %771 = vmatpush1.xpose.msra.mxu0 0.0
        %772 = vmatprep.subr.mxu0 0.0
        %773 = vmatpush1.xpose.msra.mxu0 0.0
        %774 = vmatprep.subr.mxu0 0.0
        %775 = vmatpush1.xpose.msra.mxu0 0.0
        %776 = vmatprep.subr.mxu0 0.0
        %777 = vmatpush1.xpose.msra.mxu0 0.0
        %778 = vmatprep.subr.mxu0 0.0
        %779 = vmatpush1.xpose.msra.mxu0 0.0
        %780 = vmatprep.subr.mxu0 0.0
        %781 = vmatpush1.xpose.msra.mxu0 0.0
        %782 = vmatprep.subr.mxu0 0.0
        %783 = vmatpush1.xpose.msra.mxu0 0.0
        %784 = vmatprep.subr.mxu0 0.0
        %785 = vmatpush1.xpose.msra.mxu0 0.0
        %786 = vmatprep.mubr.f32.mxu0 0.0
        %787 = vmatmul.mubr.f32.gmra.mrb[0].mxu0 %v717
        %v788 = vpop.f32.mrb[0].mxu0
        %v789 = vadd.f32 0.0, %v788
        %v790 = vpop.f32.mrb[0].mxu0
        %791 = vdwg.mxu0
        %v792 = vsel %vm715, %v789, -inf
        %793 = vmax.xlane.f32.xlu0 %v792
        %v794 = vpop.xlane.xlu0 %793
        %v795 = vsub.f32 %v789, %v794
        %v796 = vmul.f32 %v795, 1.442695
        %v797 = vpow.pop %v796
        %v798 = vsel %vm715, %v797, 0.0
        %799 = vadd.xlane.f32.xlu0 %v798
        %v800 = vpop.xlane.xlu0 %799
        %v802 = vsel %vm715, %v797, 0
        %804 = vmatprep.subr.mxu0 0.0
        %805 = vmatpush1.msra.mxu0 %v705
        %806 = vmatprep.subr.mxu0 0.0
        %807 = vmatpush1.msra.mxu0 0.0
        %808 = vmatprep.subr.mxu0 0.0
        %809 = vmatpush1.msra.mxu0 0.0
        %810 = vmatprep.subr.mxu0 0.0
        %811 = vmatpush1.msra.mxu0 0.0
        %812 = vmatprep.subr.mxu0 0.0
        %813 = vmatpush1.msra.mxu0 0.0
        %814 = vmatprep.subr.mxu0 0.0
        %815 = vmatpush1.msra.mxu0 0.0
        %816 = vmatprep.subr.mxu0 0.0
        %817 = vmatpush1.msra.mxu0 0.0
        %818 = vmatprep.subr.mxu0 0.0
        %819 = vmatpush1.msra.mxu0 0.0
        %820 = vmatprep.subr.mxu0 0.0
        %821 = vmatpush1.msra.mxu0 0.0
        %822 = vmatprep.subr.mxu0 0.0
        %823 = vmatpush1.msra.mxu0 0.0
        %824 = vmatprep.subr.mxu0 0.0
        %825 = vmatpush1.msra.mxu0 0.0
        %826 = vmatprep.subr.mxu0 0.0
        %827 = vmatpush1.msra.mxu0 0.0
        %828 = vmatprep.subr.mxu0 0.0
        %829 = vmatpush1.msra.mxu0 0.0
        %830 = vmatprep.subr.mxu0 0.0
        %831 = vmatpush1.msra.mxu0 0.0
        %832 = vmatprep.subr.mxu0 0.0
        %833 = vmatpush1.msra.mxu0 0.0
        %834 = vmatprep.subr.mxu0 0.0
        %835 = vmatpush1.msra.mxu0 0.0
        %836 = vmatprep.subr.mxu0 0.0
        %837 = vmatpush1.msra.mxu0 0.0
        %838 = vmatprep.subr.mxu0 0.0
        %839 = vmatpush1.msra.mxu0 0.0
        %840 = vmatprep.subr.mxu0 0.0
        %841 = vmatpush1.msra.mxu0 0.0
        %842 = vmatprep.subr.mxu0 0.0
        %843 = vmatpush1.msra.mxu0 0.0
        %844 = vmatprep.subr.mxu0 0.0
        %845 = vmatpush1.msra.mxu0 0.0
        %846 = vmatprep.subr.mxu0 0.0
        %847 = vmatpush1.msra.mxu0 0.0
        %848 = vmatprep.subr.mxu0 0.0
        %849 = vmatpush1.msra.mxu0 0.0
        %850 = vmatprep.subr.mxu0 0.0
        %851 = vmatpush1.msra.mxu0 0.0
        %852 = vmatprep.subr.mxu0 0.0
        %853 = vmatpush1.msra.mxu0 0.0
        %854 = vmatprep.subr.mxu0 0.0
        %855 = vmatpush1.msra.mxu0 0.0
        %856 = vmatprep.subr.mxu0 0.0
        %857 = vmatpush1.msra.mxu0 0.0
        %858 = vmatprep.subr.mxu0 0.0
        %859 = vmatpush1.msra.mxu0 0.0
        %860 = vmatprep.subr.mxu0 0.0
        %861 = vmatpush1.msra.mxu0 0.0
        %862 = vmatprep.subr.mxu0 0.0
        %863 = vmatpush1.msra.mxu0 0.0
        %864 = vmatprep.subr.mxu0 0.0
        %865 = vmatpush1.msra.mxu0 0.0
        %866 = vmatprep.subr.mxu0 0.0
        %867 = vmatpush1.msra.mxu0 0.0
        %868 = vmatprep.mubr.f32.mxu0 0.0
        %869 = vmatmul.mubr.f32.gmra.mrb[0].mxu0 %v802
        %v870 = vpop.f32.mrb[0].mxu0
        %v871 = vadd.f32 0.0, %v870
        %v872 = vpop.f32.mrb[0].mxu0
        %873 = vdwg.mxu0
        %v874 = vrcp.pop %v800
        %v875 = vmul.f32 %v871, %v874
        %v876 = vld [vmem:[%s6] sm:$0xff]
        %v877 = vld [vmem:[%s6 + $0x8] sm:$0xff]
        %v878 = vld [vmem:[%s6 + $0x10] sm:$0xff]
        %v879 = vld [vmem:[%s6 + $0x18] sm:$0xff]
        %v881 = vsel %vm715, %v875, 0
        %v884 = vsel %vm715, %v876, 0
        %v887 = vsel %vm715, %v877, 0
        %v890 = vsel %vm715, %v878, 0
        %v893 = vsel %vm715, %v879, 0
        %895 = vmatprep.subr.mxu0 0.0
        %896 = vmatpush1.xpose.msra.mxu0 %v884
        %897 = vmatprep.subr.mxu0 0.0
        %898 = vmatpush1.xpose.msra.mxu0 %v887
        %899 = vmatprep.subr.mxu0 0.0
        %900 = vmatpush1.xpose.msra.mxu0 %v890
        %901 = vmatprep.subr.mxu0 0.0
        %902 = vmatpush1.xpose.msra.mxu0 %v893
        %903 = vmatprep.subr.mxu0 0.0
        %904 = vmatpush1.xpose.msra.mxu0 0.0
        %905 = vmatprep.subr.mxu0 0.0
        %906 = vmatpush1.xpose.msra.mxu0 0.0
        %907 = vmatprep.subr.mxu0 0.0
        %908 = vmatpush1.xpose.msra.mxu0 0.0
        %909 = vmatprep.subr.mxu0 0.0
        %910 = vmatpush1.xpose.msra.mxu0 0.0
        %911 = vmatprep.subr.mxu0 0.0
        %912 = vmatpush1.xpose.msra.mxu0 0.0
        %913 = vmatprep.subr.mxu0 0.0
        %914 = vmatpush1.xpose.msra.mxu0 0.0
        %915 = vmatprep.subr.mxu0 0.0
        %916 = vmatpush1.xpose.msra.mxu0 0.0
        %917 = vmatprep.subr.mxu0 0.0
        %918 = vmatpush1.xpose.msra.mxu0 0.0
        %919 = vmatprep.subr.mxu0 0.0
        %920 = vmatpush1.xpose.msra.mxu0 0.0
        %921 = vmatprep.subr.mxu0 0.0
        %922 = vmatpush1.xpose.msra.mxu0 0.0
        %923 = vmatprep.subr.mxu0 0.0
        %924 = vmatpush1.xpose.msra.mxu0 0.0
        %925 = vmatprep.subr.mxu0 0.0
        %926 = vmatpush1.xpose.msra.mxu0 0.0
        %927 = vmatprep.subr.mxu0 0.0
        %928 = vmatpush1.xpose.msra.mxu0 0.0
        %929 = vmatprep.subr.mxu0 0.0
        %930 = vmatpush1.xpose.msra.mxu0 0.0
        %931 = vmatprep.subr.mxu0 0.0
        %932 = vmatpush1.xpose.msra.mxu0 0.0
        %933 = vmatprep.subr.mxu0 0.0
        %934 = vmatpush1.xpose.msra.mxu0 0.0
        %935 = vmatprep.subr.mxu0 0.0
        %936 = vmatpush1.xpose.msra.mxu0 0.0
        %937 = vmatprep.subr.mxu0 0.0
        %938 = vmatpush1.xpose.msra.mxu0 0.0
        %939 = vmatprep.subr.mxu0 0.0
        %940 = vmatpush1.xpose.msra.mxu0 0.0
        %941 = vmatprep.subr.mxu0 0.0
        %942 = vmatpush1.xpose.msra.mxu0 0.0
        %943 = vmatprep.subr.mxu0 0.0
        %944 = vmatpush1.xpose.msra.mxu0 0.0
        %945 = vmatprep.subr.mxu0 0.0
        %946 = vmatpush1.xpose.msra.mxu0 0.0
        %947 = vmatprep.subr.mxu0 0.0
        %948 = vmatpush1.xpose.msra.mxu0 0.0
        %949 = vmatprep.subr.mxu0 0.0
        %950 = vmatpush1.xpose.msra.mxu0 0.0
        %951 = vmatprep.subr.mxu0 0.0
        %952 = vmatpush1.xpose.msra.mxu0 0.0
        %953 = vmatprep.subr.mxu0 0.0
        %954 = vmatpush1.xpose.msra.mxu0 0.0
        %955 = vmatprep.subr.mxu0 0.0
        %956 = vmatpush1.xpose.msra.mxu0 0.0
        %957 = vmatprep.subr.mxu0 0.0
        %958 = vmatpush1.xpose.msra.mxu0 0.0
        %959 = vmatprep.mubr.f32.mxu0 0.0
        %960 = vmatmul.mubr.f32.gmra.mrb[0].mxu0 %v881
        %v961 = vpop.f32.mrb[0].mxu0
        %v962 = vadd.f32 0.0, %v961
        %v963 = vpop.f32.mrb[0].mxu0
        %964 = vdwg.mxu0
        %v965 = vadd.f32 %v713, %v962
        %966 = vrot.lane.b32.xlu0 %v513, 120
        %v967 = vpop.permute.xlu0 %966
        %968 = vrot.lane.b32.xlu0 %v609, 120
        %v969 = vpop.permute.xlu0 %968
        %v970 = vsel %vm715, %v967, 0
        %v972 = vsel %vm715, %v969, 0
        %974 = vmatprep.subr.mxu0 0.0
        %975 = vmatpush1.xpose.msra.mxu0 %v972
        %976 = vmatprep.subr.mxu0 0.0
        %977 = vmatpush1.xpose.msra.mxu0 0.0
        %978 = vmatprep.subr.mxu0 0.0
        %979 = vmatpush1.xpose.msra.mxu0 0.0
        %980 = vmatprep.subr.mxu0 0.0
        %981 = vmatpush1.xpose.msra.mxu0 0.0
        %982 = vmatprep.subr.mxu0 0.0
        %983 = vmatpush1.xpose.msra.mxu0 0.0
        %984 = vmatprep.subr.mxu0 0.0
        %985 = vmatpush1.xpose.msra.mxu0 0.0
        %986 = vmatprep.subr.mxu0 0.0
        %987 = vmatpush1.xpose.msra.mxu0 0.0
        %988 = vmatprep.subr.mxu0 0.0
        %989 = vmatpush1.xpose.msra.mxu0 0.0
        %990 = vmatprep.subr.mxu0 0.0
        %991 = vmatpush1.xpose.msra.mxu0 0.0
        %992 = vmatprep.subr.mxu0 0.0
        %993 = vmatpush1.xpose.msra.mxu0 0.0
        %994 = vmatprep.subr.mxu0 0.0
        %995 = vmatpush1.xpose.msra.mxu0 0.0
        %996 = vmatprep.subr.mxu0 0.0
        %997 = vmatpush1.xpose.msra.mxu0 0.0
        %998 = vmatprep.subr.mxu0 0.0
        %999 = vmatpush1.xpose.msra.mxu0 0.0
        %1000 = vmatprep.subr.mxu0 0.0
        %1001 = vmatpush1.xpose.msra.mxu0 0.0
        %1002 = vmatprep.subr.mxu0 0.0
        %1003 = vmatpush1.xpose.msra.mxu0 0.0
        %1004 = vmatprep.subr.mxu0 0.0
        %1005 = vmatpush1.xpose.msra.mxu0 0.0
        %1006 = vmatprep.subr.mxu0 0.0
        %1007 = vmatpush1.xpose.msra.mxu0 0.0
        %1008 = vmatprep.subr.mxu0 0.0
        %1009 = vmatpush1.xpose.msra.mxu0 0.0
        %1010 = vmatprep.subr.mxu0 0.0
        %1011 = vmatpush1.xpose.msra.mxu0 0.0
        %1012 = vmatprep.subr.mxu0 0.0
        %1013 = vmatpush1.xpose.msra.mxu0 0.0
        %1014 = vmatprep.subr.mxu0 0.0
        %1015 = vmatpush1.xpose.msra.mxu0 0.0
        %1016 = vmatprep.subr.mxu0 0.0
        %1017 = vmatpush1.xpose.msra.mxu0 0.0
        %1018 = vmatprep.subr.mxu0 0.0
        %1019 = vmatpush1.xpose.msra.mxu0 0.0
        %1020 = vmatprep.subr.mxu0 0.0
        %1021 = vmatpush1.xpose.msra.mxu0 0.0
        %1022 = vmatprep.subr.mxu0 0.0
        %1023 = vmatpush1.xpose.msra.mxu0 0.0
        %1024 = vmatprep.subr.mxu0 0.0
        %1025 = vmatpush1.xpose.msra.mxu0 0.0
        %1026 = vmatprep.subr.mxu0 0.0
        %1027 = vmatpush1.xpose.msra.mxu0 0.0
        %1028 = vmatprep.subr.mxu0 0.0
        %1029 = vmatpush1.xpose.msra.mxu0 0.0
        %1030 = vmatprep.subr.mxu0 0.0
        %1031 = vmatpush1.xpose.msra.mxu0 0.0
        %1032 = vmatprep.subr.mxu0 0.0
        %1033 = vmatpush1.xpose.msra.mxu0 0.0
        %1034 = vmatprep.subr.mxu0 0.0
        %1035 = vmatpush1.xpose.msra.mxu0 0.0
        %1036 = vmatprep.subr.mxu0 0.0
        %1037 = vmatpush1.xpose.msra.mxu0 0.0
        %1038 = vmatprep.mubr.f32.mxu0 0.0
        %1039 = vmatmul.mubr.f32.gmra.mrb[0].mxu0 %v970
        %v1040 = vpop.f32.mrb[0].mxu0
        %v1041 = vadd.f32 0.0, %v1040
        %v1042 = vpop.f32.mrb[0].mxu0
        %1043 = vdwg.mxu0
        %v1044 = vsel %vm715, %v1041, -inf
        %1045 = vmax.xlane.f32.xlu0 %v1044
        %v1046 = vpop.xlane.xlu0 %1045
        %v1047 = vsub.f32 %v1041, %v1046
        %v1048 = vmul.f32 %v1047, 1.442695
        %v1049 = vpow.pop %v1048
        %v1050 = vsel %vm715, %v1049, 0.0
        %1051 = vadd.xlane.f32.xlu0 %v1050
        %v1052 = vpop.xlane.xlu0 %1051
        %1054 = vrot.lane.b32.xlu0 %v705, 120
        %v1055 = vpop.permute.xlu0 %1054
        %v1058 = vsel %vm715, %v1049, 0
        %1060 = vmatprep.subr.mxu0 0.0
        %1061 = vmatpush1.msra.mxu0 %v1055
        %1062 = vmatprep.subr.mxu0 0.0
        %1063 = vmatpush1.msra.mxu0 0.0
        %1064 = vmatprep.subr.mxu0 0.0
        %1065 = vmatpush1.msra.mxu0 0.0
        %1066 = vmatprep.subr.mxu0 0.0
        %1067 = vmatpush1.msra.mxu0 0.0
        %1068 = vmatprep.subr.mxu0 0.0
        %1069 = vmatpush1.msra.mxu0 0.0
        %1070 = vmatprep.subr.mxu0 0.0
        %1071 = vmatpush1.msra.mxu0 0.0
        %1072 = vmatprep.subr.mxu0 0.0
        %1073 = vmatpush1.msra.mxu0 0.0
        %1074 = vmatprep.subr.mxu0 0.0
        %1075 = vmatpush1.msra.mxu0 0.0
        %1076 = vmatprep.subr.mxu0 0.0
        %1077 = vmatpush1.msra.mxu0 0.0
        %1078 = vmatprep.subr.mxu0 0.0
        %1079 = vmatpush1.msra.mxu0 0.0
        %1080 = vmatprep.subr.mxu0 0.0
        %1081 = vmatpush1.msra.mxu0 0.0
        %1082 = vmatprep.subr.mxu0 0.0
        %1083 = vmatpush1.msra.mxu0 0.0
        %1084 = vmatprep.subr.mxu0 0.0
        %1085 = vmatpush1.msra.mxu0 0.0
        %1086 = vmatprep.subr.mxu0 0.0
        %1087 = vmatpush1.msra.mxu0 0.0
        %1088 = vmatprep.subr.mxu0 0.0
        %1089 = vmatpush1.msra.mxu0 0.0
        %1090 = vmatprep.subr.mxu0 0.0
        %1091 = vmatpush1.msra.mxu0 0.0
        %1092 = vmatprep.subr.mxu0 0.0
        %1093 = vmatpush1.msra.mxu0 0.0
        %1094 = vmatprep.subr.mxu0 0.0
        %1095 = vmatpush1.msra.mxu0 0.0
        %1096 = vmatprep.subr.mxu0 0.0
        %1097 = vmatpush1.msra.mxu0 0.0
        %1098 = vmatprep.subr.mxu0 0.0
        %1099 = vmatpush1.msra.mxu0 0.0
        %1100 = vmatprep.subr.mxu0 0.0
        %1101 = vmatpush1.msra.mxu0 0.0
        %1102 = vmatprep.subr.mxu0 0.0
        %1103 = vmatpush1.msra.mxu0 0.0
        %1104 = vmatprep.subr.mxu0 0.0
        %1105 = vmatpush1.msra.mxu0 0.0
        %1106 = vmatprep.subr.mxu0 0.0
        %1107 = vmatpush1.msra.mxu0 0.0
        %1108 = vmatprep.subr.mxu0 0.0
        %1109 = vmatpush1.msra.mxu0 0.0
        %1110 = vmatprep.subr.mxu0 0.0
        %1111 = vmatpush1.msra.mxu0 0.0
        %1112 = vmatprep.subr.mxu0 0.0
        %1113 = vmatpush1.msra.mxu0 0.0
        %1114 = vmatprep.subr.mxu0 0.0
        %1115 = vmatpush1.msra.mxu0 0.0
        %1116 = vmatprep.subr.mxu0 0.0
        %1117 = vmatpush1.msra.mxu0 0.0
        %1118 = vmatprep.subr.mxu0 0.0
        %1119 = vmatpush1.msra.mxu0 0.0
        %1120 = vmatprep.subr.mxu0 0.0
        %1121 = vmatpush1.msra.mxu0 0.0
        %1122 = vmatprep.subr.mxu0 0.0
        %1123 = vmatpush1.msra.mxu0 0.0
        %1124 = vmatprep.mubr.f32.mxu0 0.0
        %1125 = vmatmul.mubr.f32.gmra.mrb[0].mxu0 %v1058
        %v1126 = vpop.f32.mrb[0].mxu0
        %v1127 = vadd.f32 0.0, %v1126
        %v1128 = vpop.f32.mrb[0].mxu0
        %1129 = vdwg.mxu0
        %v1130 = vrcp.pop %v1052
        %v1131 = vmul.f32 %v1127, %v1130
        %1132 = vrot.lane.b32.xlu0 %v876, 120
        %v1133 = vpop.permute.xlu0 %1132
        %1134 = vrot.lane.b32.xlu0 %v877, 120
        %v1135 = vpop.permute.xlu0 %1134
        %1136 = vrot.lane.b32.xlu0 %v878, 120
        %v1137 = vpop.permute.xlu0 %1136
        %1138 = vrot.lane.b32.xlu0 %v879, 120
        %v1139 = vpop.permute.xlu0 %1138
        %v1141 = vsel %vm715, %v1131, 0
        %v1143 = vsel %vm715, %v1133, 0
        %v1145 = vsel %vm715, %v1135, 0
        %v1147 = vsel %vm715, %v1137, 0
        %v1149 = vsel %vm715, %v1139, 0
        %1151 = vmatprep.subr.mxu0 0.0
        %1152 = vmatpush1.xpose.msra.mxu0 %v1143
        %1153 = vmatprep.subr.mxu0 0.0
        %1154 = vmatpush1.xpose.msra.mxu0 %v1145
        %1155 = vmatprep.subr.mxu0 0.0
        %1156 = vmatpush1.xpose.msra.mxu0 %v1147
        %1157 = vmatprep.subr.mxu0 0.0
        %1158 = vmatpush1.xpose.msra.mxu0 %v1149
        %1159 = vmatprep.subr.mxu0 0.0
        %1160 = vmatpush1.xpose.msra.mxu0 0.0
        %1161 = vmatprep.subr.mxu0 0.0
        %1162 = vmatpush1.xpose.msra.mxu0 0.0
        %1163 = vmatprep.subr.mxu0 0.0
        %1164 = vmatpush1.xpose.msra.mxu0 0.0
        %1165 = vmatprep.subr.mxu0 0.0
        %1166 = vmatpush1.xpose.msra.mxu0 0.0
        %1167 = vmatprep.subr.mxu0 0.0
        %1168 = vmatpush1.xpose.msra.mxu0 0.0
        %1169 = vmatprep.subr.mxu0 0.0
        %1170 = vmatpush1.xpose.msra.mxu0 0.0
        %1171 = vmatprep.subr.mxu0 0.0
        %1172 = vmatpush1.xpose.msra.mxu0 0.0
        %1173 = vmatprep.subr.mxu0 0.0
        %1174 = vmatpush1.xpose.msra.mxu0 0.0
        %1175 = vmatprep.subr.mxu0 0.0
        %1176 = vmatpush1.xpose.msra.mxu0 0.0
        %1177 = vmatprep.subr.mxu0 0.0
        %1178 = vmatpush1.xpose.msra.mxu0 0.0
        %1179 = vmatprep.subr.mxu0 0.0
        %1180 = vmatpush1.xpose.msra.mxu0 0.0
        %1181 = vmatprep.subr.mxu0 0.0
        %1182 = vmatpush1.xpose.msra.mxu0 0.0
        %1183 = vmatprep.subr.mxu0 0.0
        %1184 = vmatpush1.xpose.msra.mxu0 0.0
        %1185 = vmatprep.subr.mxu0 0.0
        %1186 = vmatpush1.xpose.msra.mxu0 0.0
        %1187 = vmatprep.subr.mxu0 0.0
        %1188 = vmatpush1.xpose.msra.mxu0 0.0
        %1189 = vmatprep.subr.mxu0 0.0
        %1190 = vmatpush1.xpose.msra.mxu0 0.0
        %1191 = vmatprep.subr.mxu0 0.0
        %1192 = vmatpush1.xpose.msra.mxu0 0.0
        %1193 = vmatprep.subr.mxu0 0.0
        %1194 = vmatpush1.xpose.msra.mxu0 0.0
        %1195 = vmatprep.subr.mxu0 0.0
        %1196 = vmatpush1.xpose.msra.mxu0 0.0
        %1197 = vmatprep.subr.mxu0 0.0
        %1198 = vmatpush1.xpose.msra.mxu0 0.0
        %1199 = vmatprep.subr.mxu0 0.0
        %1200 = vmatpush1.xpose.msra.mxu0 0.0
        %1201 = vmatprep.subr.mxu0 0.0
        %1202 = vmatpush1.xpose.msra.mxu0 0.0
        %1203 = vmatprep.subr.mxu0 0.0
        %1204 = vmatpush1.xpose.msra.mxu0 0.0
        %1205 = vmatprep.subr.mxu0 0.0
        %1206 = vmatpush1.xpose.msra.mxu0 0.0
        %1207 = vmatprep.subr.mxu0 0.0
        %1208 = vmatpush1.xpose.msra.mxu0 0.0
        %1209 = vmatprep.subr.mxu0 0.0
        %1210 = vmatpush1.xpose.msra.mxu0 0.0
        %1211 = vmatprep.subr.mxu0 0.0
        %1212 = vmatpush1.xpose.msra.mxu0 0.0
        %1213 = vmatprep.subr.mxu0 0.0
        %1214 = vmatpush1.xpose.msra.mxu0 0.0
        %1215 = vmatprep.mubr.f32.mxu0 0.0
        %1216 = vmatmul.mubr.f32.gmra.mrb[0].mxu0 %v1141
        %v1217 = vpop.f32.mrb[0].mxu0
        %v1218 = vadd.f32 0.0, %v1217
        %v1219 = vpop.f32.mrb[0].mxu0
        %1220 = vdwg.mxu0
        %v1221 = vadd.f32 %v965, %v1218
        %1222 = vrot.lane.b32.xlu0 %v513, 112
        %v1223 = vpop.permute.xlu0 %1222
        %1224 = vrot.lane.b32.xlu0 %v609, 112
        %v1225 = vpop.permute.xlu0 %1224
        %v1226 = vsel %vm715, %v1223, 0
        %v1228 = vsel %vm715, %v1225, 0
        %1230 = vmatprep.subr.mxu0 0.0
        %1231 = vmatpush1.xpose.msra.mxu0 %v1228
        %1232 = vmatprep.subr.mxu0 0.0
        %1233 = vmatpush1.xpose.msra.mxu0 0.0
        %1234 = vmatprep.subr.mxu0 0.0
        %1235 = vmatpush1.xpose.msra.mxu0 0.0
        %1236 = vmatprep.subr.mxu0 0.0
        %1237 = vmatpush1.xpose.msra.mxu0 0.0
        %1238 = vmatprep.subr.mxu0 0.0
        %1239 = vmatpush1.xpose.msra.mxu0 0.0
        %1240 = vmatprep.subr.mxu0 0.0
        %1241 = vmatpush1.xpose.msra.mxu0 0.0
        %1242 = vmatprep.subr.mxu0 0.0
        %1243 = vmatpush1.xpose.msra.mxu0 0.0
        %1244 = vmatprep.subr.mxu0 0.0
        %1245 = vmatpush1.xpose.msra.mxu0 0.0
        %1246 = vmatprep.subr.mxu0 0.0
        %1247 = vmatpush1.xpose.msra.mxu0 0.0
        %1248 = vmatprep.subr.mxu0 0.0
        %1249 = vmatpush1.xpose.msra.mxu0 0.0
        %1250 = vmatprep.subr.mxu0 0.0
        %1251 = vmatpush1.xpose.msra.mxu0 0.0
        %1252 = vmatprep.subr.mxu0 0.0
        %1253 = vmatpush1.xpose.msra.mxu0 0.0
        %1254 = vmatprep.subr.mxu0 0.0
        %1255 = vmatpush1.xpose.msra.mxu0 0.0
        %1256 = vmatprep.subr.mxu0 0.0
        %1257 = vmatpush1.xpose.msra.mxu0 0.0
        %1258 = vmatprep.subr.mxu0 0.0
        %1259 = vmatpush1.xpose.msra.mxu0 0.0
        %1260 = vmatprep.subr.mxu0 0.0
        %1261 = vmatpush1.xpose.msra.mxu0 0.0
        %1262 = vmatprep.subr.mxu0 0.0
        %1263 = vmatpush1.xpose.msra.mxu0 0.0
        %1264 = vmatprep.subr.mxu0 0.0
        %1265 = vmatpush1.xpose.msra.mxu0 0.0
        %1266 = vmatprep.subr.mxu0 0.0
        %1267 = vmatpush1.xpose.msra.mxu0 0.0
        %1268 = vmatprep.subr.mxu0 0.0
        %1269 = vmatpush1.xpose.msra.mxu0 0.0
        %1270 = vmatprep.subr.mxu0 0.0
        %1271 = vmatpush1.xpose.msra.mxu0 0.0
        %1272 = vmatprep.subr.mxu0 0.0
        %1273 = vmatpush1.xpose.msra.mxu0 0.0
        %1274 = vmatprep.subr.mxu0 0.0
        %1275 = vmatpush1.xpose.msra.mxu0 0.0
        %1276 = vmatprep.subr.mxu0 0.0
        %1277 = vmatpush1.xpose.msra.mxu0 0.0
        %1278 = vmatprep.subr.mxu0 0.0
        %1279 = vmatpush1.xpose.msra.mxu0 0.0
        %1280 = vmatprep.subr.mxu0 0.0
        %1281 = vmatpush1.xpose.msra.mxu0 0.0
        %1282 = vmatprep.subr.mxu0 0.0
        %1283 = vmatpush1.xpose.msra.mxu0 0.0
        %1284 = vmatprep.subr.mxu0 0.0
        %1285 = vmatpush1.xpose.msra.mxu0 0.0
        %1286 = vmatprep.subr.mxu0 0.0
        %1287 = vmatpush1.xpose.msra.mxu0 0.0
        %1288 = vmatprep.subr.mxu0 0.0
        %1289 = vmatpush1.xpose.msra.mxu0 0.0
        %1290 = vmatprep.subr.mxu0 0.0
        %1291 = vmatpush1.xpose.msra.mxu0 0.0
        %1292 = vmatprep.subr.mxu0 0.0
        %1293 = vmatpush1.xpose.msra.mxu0 0.0
        %1294 = vmatprep.mubr.f32.mxu0 0.0
        %1295 = vmatmul.mubr.f32.gmra.mrb[0].mxu0 %v1226
        %v1296 = vpop.f32.mrb[0].mxu0
        %v1297 = vadd.f32 0.0, %v1296
        %v1298 = vpop.f32.mrb[0].mxu0
        %1299 = vdwg.mxu0
        %v1300 = vsel %vm715, %v1297, -inf
        %1301 = vmax.xlane.f32.xlu0 %v1300
        %v1302 = vpop.xlane.xlu0 %1301
        %v1303 = vsub.f32 %v1297, %v1302
        %v1304 = vmul.f32 %v1303, 1.442695
        %v1305 = vpow.pop %v1304
        %v1306 = vsel %vm715, %v1305, 0.0
        %1307 = vadd.xlane.f32.xlu0 %v1306
        %v1308 = vpop.xlane.xlu0 %1307
        %1309 = vrot.lane.b32.xlu0 %v705, 112
        %v1310 = vpop.permute.xlu0 %1309
        %v1313 = vsel %vm715, %v1305, 0
        %1315 = vmatprep.subr.mxu0 0.0
        %1316 = vmatpush1.msra.mxu0 %v1310
        %1317 = vmatprep.subr.mxu0 0.0
        %1318 = vmatpush1.msra.mxu0 0.0
        %1319 = vmatprep.subr.mxu0 0.0
        %1320 = vmatpush1.msra.mxu0 0.0
        %1321 = vmatprep.subr.mxu0 0.0
        %1322 = vmatpush1.msra.mxu0 0.0
        %1323 = vmatprep.subr.mxu0 0.0
        %1324 = vmatpush1.msra.mxu0 0.0
        %1325 = vmatprep.subr.mxu0 0.0
        %1326 = vmatpush1.msra.mxu0 0.0
        %1327 = vmatprep.subr.mxu0 0.0
        %1328 = vmatpush1.msra.mxu0 0.0
        %1329 = vmatprep.subr.mxu0 0.0
        %1330 = vmatpush1.msra.mxu0 0.0
        %1331 = vmatprep.subr.mxu0 0.0
        %1332 = vmatpush1.msra.mxu0 0.0
        %1333 = vmatprep.subr.mxu0 0.0
        %1334 = vmatpush1.msra.mxu0 0.0
        %1335 = vmatprep.subr.mxu0 0.0
        %1336 = vmatpush1.msra.mxu0 0.0
        %1337 = vmatprep.subr.mxu0 0.0
        %1338 = vmatpush1.msra.mxu0 0.0
        %1339 = vmatprep.subr.mxu0 0.0
        %1340 = vmatpush1.msra.mxu0 0.0
        %1341 = vmatprep.subr.mxu0 0.0
        %1342 = vmatpush1.msra.mxu0 0.0
        %1343 = vmatprep.subr.mxu0 0.0
        %1344 = vmatpush1.msra.mxu0 0.0
        %1345 = vmatprep.subr.mxu0 0.0
        %1346 = vmatpush1.msra.mxu0 0.0
        %1347 = vmatprep.subr.mxu0 0.0
        %1348 = vmatpush1.msra.mxu0 0.0
        %1349 = vmatprep.subr.mxu0 0.0
        %1350 = vmatpush1.msra.mxu0 0.0
        %1351 = vmatprep.subr.mxu0 0.0
        %1352 = vmatpush1.msra.mxu0 0.0
        %1353 = vmatprep.subr.mxu0 0.0
        %1354 = vmatpush1.msra.mxu0 0.0
        %1355 = vmatprep.subr.mxu0 0.0
        %1356 = vmatpush1.msra.mxu0 0.0
        %1357 = vmatprep.subr.mxu0 0.0
        %1358 = vmatpush1.msra.mxu0 0.0
        %1359 = vmatprep.subr.mxu0 0.0
        %1360 = vmatpush1.msra.mxu0 0.0
        %1361 = vmatprep.subr.mxu0 0.0
        %1362 = vmatpush1.msra.mxu0 0.0
        %1363 = vmatprep.subr.mxu0 0.0
        %1364 = vmatpush1.msra.mxu0 0.0
        %1365 = vmatprep.subr.mxu0 0.0
        %1366 = vmatpush1.msra.mxu0 0.0
        %1367 = vmatprep.subr.mxu0 0.0
        %1368 = vmatpush1.msra.mxu0 0.0
        %1369 = vmatprep.subr.mxu0 0.0
        %1370 = vmatpush1.msra.mxu0 0.0
        %1371 = vmatprep.subr.mxu0 0.0
        %1372 = vmatpush1.msra.mxu0 0.0
        %1373 = vmatprep.subr.mxu0 0.0
        %1374 = vmatpush1.msra.mxu0 0.0
        %1375 = vmatprep.subr.mxu0 0.0
        %1376 = vmatpush1.msra.mxu0 0.0
        %1377 = vmatprep.subr.mxu0 0.0
        %1378 = vmatpush1.msra.mxu0 0.0
        %1379 = vmatprep.mubr.f32.mxu0 0.0
        %1380 = vmatmul.mubr.f32.gmra.mrb[0].mxu0 %v1313
        %v1381 = vpop.f32.mrb[0].mxu0
        %v1382 = vadd.f32 0.0, %v1381
        %v1383 = vpop.f32.mrb[0].mxu0
        %1384 = vdwg.mxu0
        %v1385 = vrcp.pop %v1308
        %v1386 = vmul.f32 %v1382, %v1385
        %1387 = vrot.lane.b32.xlu0 %v876, 112
        %v1388 = vpop.permute.xlu0 %1387
        %1389 = vrot.lane.b32.xlu0 %v877, 112
        %v1390 = vpop.permute.xlu0 %1389
        %1391 = vrot.lane.b32.xlu0 %v878, 112
        %v1392 = vpop.permute.xlu0 %1391
        %1393 = vrot.lane.b32.xlu0 %v879, 112
        %v1394 = vpop.permute.xlu0 %1393
        %v1396 = vsel %vm715, %v1386, 0
        %v1398 = vsel %vm715, %v1388, 0
        %v1400 = vsel %vm715, %v1390, 0
        %v1402 = vsel %vm715, %v1392, 0
        %v1404 = vsel %vm715, %v1394, 0
        %1406 = vmatprep.subr.mxu0 0.0
        %1407 = vmatpush1.xpose.msra.mxu0 %v1398
        %1408 = vmatprep.subr.mxu0 0.0
        %1409 = vmatpush1.xpose.msra.mxu0 %v1400
        %1410 = vmatprep.subr.mxu0 0.0
        %1411 = vmatpush1.xpose.msra.mxu0 %v1402
        %1412 = vmatprep.subr.mxu0 0.0
        %1413 = vmatpush1.xpose.msra.mxu0 %v1404
        %1414 = vmatprep.subr.mxu0 0.0
        %1415 = vmatpush1.xpose.msra.mxu0 0.0
        %1416 = vmatprep.subr.mxu0 0.0
        %1417 = vmatpush1.xpose.msra.mxu0 0.0
        %1418 = vmatprep.subr.mxu0 0.0
        %1419 = vmatpush1.xpose.msra.mxu0 0.0
        %1420 = vmatprep.subr.mxu0 0.0
        %1421 = vmatpush1.xpose.msra.mxu0 0.0
        %1422 = vmatprep.subr.mxu0 0.0
        %1423 = vmatpush1.xpose.msra.mxu0 0.0
        %1424 = vmatprep.subr.mxu0 0.0
        %1425 = vmatpush1.xpose.msra.mxu0 0.0
        %1426 = vmatprep.subr.mxu0 0.0
        %1427 = vmatpush1.xpose.msra.mxu0 0.0
        %1428 = vmatprep.subr.mxu0 0.0
        %1429 = vmatpush1.xpose.msra.mxu0 0.0
        %1430 = vmatprep.subr.mxu0 0.0
        %1431 = vmatpush1.xpose.msra.mxu0 0.0
        %1432 = vmatprep.subr.mxu0 0.0
        %1433 = vmatpush1.xpose.msra.mxu0 0.0
        %1434 = vmatprep.subr.mxu0 0.0
        %1435 = vmatpush1.xpose.msra.mxu0 0.0
        %1436 = vmatprep.subr.mxu0 0.0
        %1437 = vmatpush1.xpose.msra.mxu0 0.0
        %1438 = vmatprep.subr.mxu0 0.0
        %1439 = vmatpush1.xpose.msra.mxu0 0.0
        %1440 = vmatprep.subr.mxu0 0.0
        %1441 = vmatpush1.xpose.msra.mxu0 0.0
        %1442 = vmatprep.subr.mxu0 0.0
        %1443 = vmatpush1.xpose.msra.mxu0 0.0
        %1444 = vmatprep.subr.mxu0 0.0
        %1445 = vmatpush1.xpose.msra.mxu0 0.0
        %1446 = vmatprep.subr.mxu0 0.0
        %1447 = vmatpush1.xpose.msra.mxu0 0.0
        %1448 = vmatprep.subr.mxu0 0.0
        %1449 = vmatpush1.xpose.msra.mxu0 0.0
        %1450 = vmatprep.subr.mxu0 0.0
        %1451 = vmatpush1.xpose.msra.mxu0 0.0
        %1452 = vmatprep.subr.mxu0 0.0
        %1453 = vmatpush1.xpose.msra.mxu0 0.0
        %1454 = vmatprep.subr.mxu0 0.0
        %1455 = vmatpush1.xpose.msra.mxu0 0.0
        %1456 = vmatprep.subr.mxu0 0.0
        %1457 = vmatpush1.xpose.msra.mxu0 0.0
        %1458 = vmatprep.subr.mxu0 0.0
        %1459 = vmatpush1.xpose.msra.mxu0 0.0
        %1460 = vmatprep.subr.mxu0 0.0
        %1461 = vmatpush1.xpose.msra.mxu0 0.0
        %1462 = vmatprep.subr.mxu0 0.0
        %1463 = vmatpush1.xpose.msra.mxu0 0.0
        %1464 = vmatprep.subr.mxu0 0.0
        %1465 = vmatpush1.xpose.msra.mxu0 0.0
        %1466 = vmatprep.subr.mxu0 0.0
        %1467 = vmatpush1.xpose.msra.mxu0 0.0
        %1468 = vmatprep.subr.mxu0 0.0
        %1469 = vmatpush1.xpose.msra.mxu0 0.0
        %1470 = vmatprep.mubr.f32.mxu0 0.0
        %1471 = vmatmul.mubr.f32.gmra.mrb[0].mxu0 %v1396
        %v1472 = vpop.f32.mrb[0].mxu0
        %v1473 = vadd.f32 0.0, %v1472
        %v1474 = vpop.f32.mrb[0].mxu0
        %1475 = vdwg.mxu0
        %v1476 = vadd.f32 %v1221, %v1473
        %1477 = vrot.lane.b32.xlu0 %v513, 104
        %v1478 = vpop.permute.xlu0 %1477
        %1479 = vrot.lane.b32.xlu0 %v609, 104
        %v1480 = vpop.permute.xlu0 %1479
        %v1481 = vsel %vm715, %v1478, 0
        %v1483 = vsel %vm715, %v1480, 0
        %1485 = vmatprep.subr.mxu0 0.0
        %1486 = vmatpush1.xpose.msra.mxu0 %v1483
        %1487 = vmatprep.subr.mxu0 0.0
        %1488 = vmatpush1.xpose.msra.mxu0 0.0
        %1489 = vmatprep.subr.mxu0 0.0
        %1490 = vmatpush1.xpose.msra.mxu0 0.0
        %1491 = vmatprep.subr.mxu0 0.0
        %1492 = vmatpush1.xpose.msra.mxu0 0.0
        %1493 = vmatprep.subr.mxu0 0.0
        %1494 = vmatpush1.xpose.msra.mxu0 0.0
        %1495 = vmatprep.subr.mxu0 0.0
        %1496 = vmatpush1.xpose.msra.mxu0 0.0
        %1497 = vmatprep.subr.mxu0 0.0
        %1498 = vmatpush1.xpose.msra.mxu0 0.0
        %1499 = vmatprep.subr.mxu0 0.0
        %1500 = vmatpush1.xpose.msra.mxu0 0.0
        %1501 = vmatprep.subr.mxu0 0.0
        %1502 = vmatpush1.xpose.msra.mxu0 0.0
        %1503 = vmatprep.subr.mxu0 0.0
        %1504 = vmatpush1.xpose.msra.mxu0 0.0
        %1505 = vmatprep.subr.mxu0 0.0
        %1506 = vmatpush1.xpose.msra.mxu0 0.0
        %1507 = vmatprep.subr.mxu0 0.0
        %1508 = vmatpush1.xpose.msra.mxu0 0.0
        %1509 = vmatprep.subr.mxu0 0.0
        %1510 = vmatpush1.xpose.msra.mxu0 0.0
        %1511 = vmatprep.subr.mxu0 0.0
        %1512 = vmatpush1.xpose.msra.mxu0 0.0
        %1513 = vmatprep.subr.mxu0 0.0
        %1514 = vmatpush1.xpose.msra.mxu0 0.0
        %1515 = vmatprep.subr.mxu0 0.0
        %1516 = vmatpush1.xpose.msra.mxu0 0.0
        %1517 = vmatprep.subr.mxu0 0.0
        %1518 = vmatpush1.xpose.msra.mxu0 0.0
        %1519 = vmatprep.subr.mxu0 0.0
        %1520 = vmatpush1.xpose.msra.mxu0 0.0
        %1521 = vmatprep.subr.mxu0 0.0
        %1522 = vmatpush1.xpose.msra.mxu0 0.0
        %1523 = vmatprep.subr.mxu0 0.0
        %1524 = vmatpush1.xpose.msra.mxu0 0.0
        %1525 = vmatprep.subr.mxu0 0.0
        %1526 = vmatpush1.xpose.msra.mxu0 0.0
        %1527 = vmatprep.subr.mxu0 0.0
        %1528 = vmatpush1.xpose.msra.mxu0 0.0
        %1529 = vmatprep.subr.mxu0 0.0
        %1530 = vmatpush1.xpose.msra.mxu0 0.0
        %1531 = vmatprep.subr.mxu0 0.0
        %1532 = vmatpush1.xpose.msra.mxu0 0.0
        %1533 = vmatprep.subr.mxu0 0.0
        %1534 = vmatpush1.xpose.msra.mxu0 0.0
        %1535 = vmatprep.subr.mxu0 0.0
        %1536 = vmatpush1.xpose.msra.mxu0 0.0
        %1537 = vmatprep.subr.mxu0 0.0
        %1538 = vmatpush1.xpose.msra.mxu0 0.0
        %1539 = vmatprep.subr.mxu0 0.0
        %1540 = vmatpush1.xpose.msra.mxu0 0.0
        %1541 = vmatprep.subr.mxu0 0.0
        %1542 = vmatpush1.xpose.msra.mxu0 0.0
        %1543 = vmatprep.subr.mxu0 0.0
        %1544 = vmatpush1.xpose.msra.mxu0 0.0
        %1545 = vmatprep.subr.mxu0 0.0
        %1546 = vmatpush1.xpose.msra.mxu0 0.0
        %1547 = vmatprep.subr.mxu0 0.0
        %1548 = vmatpush1.xpose.msra.mxu0 0.0
        %1549 = vmatprep.mubr.f32.mxu0 0.0
        %1550 = vmatmul.mubr.f32.gmra.mrb[0].mxu0 %v1481
        %v1551 = vpop.f32.mrb[0].mxu0
        %v1552 = vadd.f32 0.0, %v1551
        %v1553 = vpop.f32.mrb[0].mxu0
        %1554 = vdwg.mxu0
        %v1555 = vsel %vm715, %v1552, -inf
        %1556 = vmax.xlane.f32.xlu0 %v1555
        %v1557 = vpop.xlane.xlu0 %1556
        %v1558 = vsub.f32 %v1552, %v1557
        %v1559 = vmul.f32 %v1558, 1.442695
        %v1560 = vpow.pop %v1559
        %v1561 = vsel %vm715, %v1560, 0.0
        %1562 = vadd.xlane.f32.xlu0 %v1561
        %v1563 = vpop.xlane.xlu0 %1562
        %1564 = vrot.lane.b32.xlu0 %v705, 104
        %v1565 = vpop.permute.xlu0 %1564
        %v1568 = vsel %vm715, %v1560, 0
        %1570 = vmatprep.subr.mxu0 0.0
        %1571 = vmatpush1.msra.mxu0 %v1565
        %1572 = vmatprep.subr.mxu0 0.0
        %1573 = vmatpush1.msra.mxu0 0.0
        %1574 = vmatprep.subr.mxu0 0.0
        %1575 = vmatpush1.msra.mxu0 0.0
        %1576 = vmatprep.subr.mxu0 0.0
        %1577 = vmatpush1.msra.mxu0 0.0
        %1578 = vmatprep.subr.mxu0 0.0
        %1579 = vmatpush1.msra.mxu0 0.0
        %1580 = vmatprep.subr.mxu0 0.0
        %1581 = vmatpush1.msra.mxu0 0.0
        %1582 = vmatprep.subr.mxu0 0.0
        %1583 = vmatpush1.msra.mxu0 0.0
        %1584 = vmatprep.subr.mxu0 0.0
        %1585 = vmatpush1.msra.mxu0 0.0
        %1586 = vmatprep.subr.mxu0 0.0
        %1587 = vmatpush1.msra.mxu0 0.0
        %1588 = vmatprep.subr.mxu0 0.0
        %1589 = vmatpush1.msra.mxu0 0.0
        %1590 = vmatprep.subr.mxu0 0.0
        %1591 = vmatpush1.msra.mxu0 0.0
        %1592 = vmatprep.subr.mxu0 0.0
        %1593 = vmatpush1.msra.mxu0 0.0
        %1594 = vmatprep.subr.mxu0 0.0
        %1595 = vmatpush1.msra.mxu0 0.0
        %1596 = vmatprep.subr.mxu0 0.0
        %1597 = vmatpush1.msra.mxu0 0.0
        %1598 = vmatprep.subr.mxu0 0.0
        %1599 = vmatpush1.msra.mxu0 0.0
        %1600 = vmatprep.subr.mxu0 0.0
        %1601 = vmatpush1.msra.mxu0 0.0
        %1602 = vmatprep.subr.mxu0 0.0
        %1603 = vmatpush1.msra.mxu0 0.0
        %1604 = vmatprep.subr.mxu0 0.0
        %1605 = vmatpush1.msra.mxu0 0.0
        %1606 = vmatprep.subr.mxu0 0.0
        %1607 = vmatpush1.msra.mxu0 0.0
        %1608 = vmatprep.subr.mxu0 0.0
        %1609 = vmatpush1.msra.mxu0 0.0
        %1610 = vmatprep.subr.mxu0 0.0
        %1611 = vmatpush1.msra.mxu0 0.0
        %1612 = vmatprep.subr.mxu0 0.0
        %1613 = vmatpush1.msra.mxu0 0.0
        %1614 = vmatprep.subr.mxu0 0.0
        %1615 = vmatpush1.msra.mxu0 0.0
        %1616 = vmatprep.subr.mxu0 0.0
        %1617 = vmatpush1.msra.mxu0 0.0
        %1618 = vmatprep.subr.mxu0 0.0
        %1619 = vmatpush1.msra.mxu0 0.0
        %1620 = vmatprep.subr.mxu0 0.0
        %1621 = vmatpush1.msra.mxu0 0.0
        %1622 = vmatprep.subr.mxu0 0.0
        %1623 = vmatpush1.msra.mxu0 0.0
        %1624 = vmatprep.subr.mxu0 0.0
        %1625 = vmatpush1.msra.mxu0 0.0
        %1626 = vmatprep.subr.mxu0 0.0
        %1627 = vmatpush1.msra.mxu0 0.0
        %1628 = vmatprep.subr.mxu0 0.0
        %1629 = vmatpush1.msra.mxu0 0.0
        %1630 = vmatprep.subr.mxu0 0.0
        %1631 = vmatpush1.msra.mxu0 0.0
        %1632 = vmatprep.subr.mxu0 0.0
        %1633 = vmatpush1.msra.mxu0 0.0
        %1634 = vmatprep.mubr.f32.mxu0 0.0
        %1635 = vmatmul.mubr.f32.gmra.mrb[0].mxu0 %v1568
        %v1636 = vpop.f32.mrb[0].mxu0
        %v1637 = vadd.f32 0.0, %v1636
        %v1638 = vpop.f32.mrb[0].mxu0
        %1639 = vdwg.mxu0
        %v1640 = vrcp.pop %v1563
        %v1641 = vmul.f32 %v1637, %v1640
        %1642 = vrot.lane.b32.xlu0 %v876, 104
        %v1643 = vpop.permute.xlu0 %1642
        %1644 = vrot.lane.b32.xlu0 %v877, 104
        %v1645 = vpop.permute.xlu0 %1644
        %1646 = vrot.lane.b32.xlu0 %v878, 104
        %v1647 = vpop.permute.xlu0 %1646
        %1648 = vrot.lane.b32.xlu0 %v879, 104
        %v1649 = vpop.permute.xlu0 %1648
        %v1651 = vsel %vm715, %v1641, 0
        %v1653 = vsel %vm715, %v1643, 0
        %v1655 = vsel %vm715, %v1645, 0
        %v1657 = vsel %vm715, %v1647, 0
        %v1659 = vsel %vm715, %v1649, 0
        %1661 = vmatprep.subr.mxu0 0.0
        %1662 = vmatpush1.xpose.msra.mxu0 %v1653
        %1663 = vmatprep.subr.mxu0 0.0
        %1664 = vmatpush1.xpose.msra.mxu0 %v1655
        %1665 = vmatprep.subr.mxu0 0.0
        %1666 = vmatpush1.xpose.msra.mxu0 %v1657
        %1667 = vmatprep.subr.mxu0 0.0
        %1668 = vmatpush1.xpose.msra.mxu0 %v1659
        %1669 = vmatprep.subr.mxu0 0.0
        %1670 = vmatpush1.xpose.msra.mxu0 0.0
        %1671 = vmatprep.subr.mxu0 0.0
        %1672 = vmatpush1.xpose.msra.mxu0 0.0
        %1673 = vmatprep.subr.mxu0 0.0
        %1674 = vmatpush1.xpose.msra.mxu0 0.0
        %1675 = vmatprep.subr.mxu0 0.0
        %1676 = vmatpush1.xpose.msra.mxu0 0.0
        %1677 = vmatprep.subr.mxu0 0.0
        %1678 = vmatpush1.xpose.msra.mxu0 0.0
        %1679 = vmatprep.subr.mxu0 0.0
        %1680 = vmatpush1.xpose.msra.mxu0 0.0
        %1681 = vmatprep.subr.mxu0 0.0
        %1682 = vmatpush1.xpose.msra.mxu0 0.0
        %1683 = vmatprep.subr.mxu0 0.0
        %1684 = vmatpush1.xpose.msra.mxu0 0.0
        %1685 = vmatprep.subr.mxu0 0.0
        %1686 = vmatpush1.xpose.msra.mxu0 0.0
        %1687 = vmatprep.subr.mxu0 0.0
        %1688 = vmatpush1.xpose.msra.mxu0 0.0
        %1689 = vmatprep.subr.mxu0 0.0
        %1690 = vmatpush1.xpose.msra.mxu0 0.0
        %1691 = vmatprep.subr.mxu0 0.0
        %1692 = vmatpush1.xpose.msra.mxu0 0.0
        %1693 = vmatprep.subr.mxu0 0.0
        %1694 = vmatpush1.xpose.msra.mxu0 0.0
        %1695 = vmatprep.subr.mxu0 0.0
        %1696 = vmatpush1.xpose.msra.mxu0 0.0
        %1697 = vmatprep.subr.mxu0 0.0
        %1698 = vmatpush1.xpose.msra.mxu0 0.0
        %1699 = vmatprep.subr.mxu0 0.0
        %1700 = vmatpush1.xpose.msra.mxu0 0.0
        %1701 = vmatprep.subr.mxu0 0.0
        %1702 = vmatpush1.xpose.msra.mxu0 0.0
        %1703 = vmatprep.subr.mxu0 0.0
        %1704 = vmatpush1.xpose.msra.mxu0 0.0
        %1705 = vmatprep.subr.mxu0 0.0
        %1706 = vmatpush1.xpose.msra.mxu0 0.0
        %1707 = vmatprep.subr.mxu0 0.0
        %1708 = vmatpush1.xpose.msra.mxu0 0.0
        %1709 = vmatprep.subr.mxu0 0.0
        %1710 = vmatpush1.xpose.msra.mxu0 0.0
        %1711 = vmatprep.subr.mxu0 0.0
        %1712 = vmatpush1.xpose.msra.mxu0 0.0
        %1713 = vmatprep.subr.mxu0 0.0
        %1714 = vmatpush1.xpose.msra.mxu0 0.0
        %1715 = vmatprep.subr.mxu0 0.0
        %1716 = vmatpush1.xpose.msra.mxu0 0.0
        %1717 = vmatprep.subr.mxu0 0.0
        %1718 = vmatpush1.xpose.msra.mxu0 0.0
        %1719 = vmatprep.subr.mxu0 0.0
        %1720 = vmatpush1.xpose.msra.mxu0 0.0
        %1721 = vmatprep.subr.mxu0 0.0
        %1722 = vmatpush1.xpose.msra.mxu0 0.0
        %1723 = vmatprep.subr.mxu0 0.0
        %1724 = vmatpush1.xpose.msra.mxu0 0.0
        %1725 = vmatprep.mubr.f32.mxu0 0.0
        %1726 = vmatmul.mubr.f32.gmra.mrb[0].mxu0 %v1651
        %v1727 = vpop.f32.mrb[0].mxu0
        %v1728 = vadd.f32 0.0, %v1727
        %v1729 = vpop.f32.mrb[0].mxu0
        %1730 = vdwg.mxu0
        %v1731 = vadd.f32 %v1476, %v1728
        %1732 = vst.msk [vmem:[%s403] sm:$0xff] %vm430, %v1731
        %s1733 = sand.u32 %s279, 1
        %s1734 = scalar_lea.sflag [#allocation3], %s1733
        %s1735 = sand.u32 %s279, 1
        %s1736 = smul.addr %s1735, 8
        %s1737 = scalar_lea.vmem [#allocation2], %s1736
        // Predicated region
        $region65: #{cross_attention.1} parent=63 // pred_check
          %p1738 = pneg %p289
        $region66: #{cross_attention.1} parent=63 // pred_check_branch
          %1740 = sbr.rel (%p1738) target = $region68
        $region67: #{cross_attention.1} parent=63 // pred_region
          %s1742 = ssub.s32 128, 128
          %1743 = vsyncadd %s1734, %s1742
          %s1744 = smul.addr %s25, 128
          %s1745 = scalar_lea.hbm %s11, %s1744
          %s1747 = sshll.u32 %s1737, 4
          %s1748 = int_to_ptr.vmem [resolvable:$true] %s1747
          %1750 = dma.vmem_to_hbm [thread:$0]  %s1748, 128, %s1745, %s1734
        $region68: #{cross_attention.1} parent=63 // pred_fallthru
          _
      $region64: #{cross_attention.1} parent=5 // pred_fallthru
        _
      %p1751 = scmp.le.s32.totalorder 2, %s20
      // Predicated region
      $region69: #{cross_attention.1} parent=5 // pred_check
        %p1752 = pneg %p1751
      $region70: #{cross_attention.1} parent=5 // pred_check_branch
        %1754 = sbr.rel (%p1752) target = $region72
      $region71: #{cross_attention.1} parent=5 // pred_region
        %s1755 = ssub.s32 %s20, 2
        // Predicated region
        $region73: #{cross_attention.1} parent=71 // pred_check
          %p1756 = pneg %p295
        $region74: #{cross_attention.1} parent=71 // pred_check_branch
          %1758 = sbr.rel (%p1756) target = $region76
        $region75: #{cross_attention.1} parent=71 // pred_region
          %s1759 = sand.u32 %s280, 1
          %s1760 = scalar_lea.sflag [#allocation3], %s1759
          %s1761 = sand.u32 %s280, 1
          %s1762 = smul.addr %s1761, 8
          %s1763 = scalar_lea.vmem [#allocation2], %s1762
          %1764 = dma.done %s1760, 128
        $region76: #{cross_attention.1} parent=71 // pred_fallthru
          _
      $region72: #{cross_attention.1} parent=5 // pred_fallthru
        _
    $region6: #{cross_attention.1} parent=1 // loop_footer
      %s24 = sadd.s32 1, %s20
    $region7: #{cross_attention.1} parent=1 // loop_footer_branch
      %19 = sbr.rel target = $region3
    $region8: #{cross_attention.1} parent=1 // loop_exit
      _
    %1765 = vsyncpa [#allocation3], 1
    %s1766 = scalar_lea.sflag [#allocation3], 1
    %1767 = vsyncpa %s1766, 1

</llo_original>
